<compile_context>
chip_gen: v6e
topology: v6e:2x2x1
jax: 0.10.0
libtpu: 0.0.40
codegen_flags: <defaults>
</compile_context>

<pallas_src>
import jax
import jax.numpy as jnp
from jax.experimental import pallas as pl
from jax.experimental.pallas import tpu as pltpu

EPS = 1e-5          # nn.BatchNorm2d default eps
NEG_SLOPE = 0.01    # nn.LeakyReLU default negative_slope
LANE = 128          # TPU lane width: channel / packed-K dims padded to this
VMEM_LIMIT = 32 * 1024 * 1024   # leaves headroom even on v7x (64 MiB physical)


# ----------------------------------------------------------------------------
# Phase 1: 3x3 conv as ONE packed-K MXU matmul + BN partial statistics.
# ----------------------------------------------------------------------------
def _conv_stats_kernel(p_ref, w_ref, y_ref, stats_ref):
    # p_ref:     (TR, 128)    bf16  im2col patch rows (9*Cin zero-padded to 128)
    # w_ref:     (128, Cpad)  bf16  packed conv weight
    # y_ref:     (TR, Cpad)   bf16  pre-BN conv output (lane-dense)
    # stats_ref: (1, 2, Cpad) f32   row 0: sum, row 1: sum of squares
    acc = jnp.dot(p_ref[...], w_ref[...], preferred_element_type=jnp.float32)
    y_ref[...] = acc.astype(y_ref.dtype)
    # Per-channel partials for global BatchNorm stats, taken from the f32
    # accumulator (before the bf16 store) in a single sweep.
    s = jnp.sum(acc, axis=0, keepdims=True)
    sq = jnp.sum(acc * acc, axis=0, keepdims=True)
    stats_ref[0] = jnp.concatenate([s, sq], axis=0)


def conv_with_stats(patches, w_packed, rows_tile):
    """patches: (R, 128) bf16; w_packed: (128, Cpad) bf16."""
    r, k = patches.shape
    cpad = w_packed.shape[-1]
    nt = r // rows_tile
    return pl.pallas_call(
        _conv_stats_kernel,
        out_shape=(
            jax.ShapeDtypeStruct((r, cpad), jnp.bfloat16),
            jax.ShapeDtypeStruct((nt, 2, cpad), jnp.float32),
        ),
        grid=(nt,),
        in_specs=[
            pl.BlockSpec((rows_tile, k), lambda i: (i, 0)),
            pl.BlockSpec((k, cpad), lambda i: (0, 0)),
        ],
        out_specs=(
            pl.BlockSpec((rows_tile, cpad), lambda i: (i, 0)),
            pl.BlockSpec((1, 2, cpad), lambda i: (i, 0, 0)),
        ),
        compiler_params=pltpu.CompilerParams(
            dimension_semantics=("parallel",),
            vmem_limit_bytes=VMEM_LIMIT,
        ),
    )(patches, w_packed)


# ----------------------------------------------------------------------------
# Phase 2: fused BatchNorm affine (single FMA) + LeakyReLU.
# ----------------------------------------------------------------------------
def _bn_lrelu_kernel(y_ref, scale_ref, shift_ref, o_ref):
    z = y_ref[...].astype(jnp.float32) * scale_ref[...] + shift_ref[...]
    o_ref[...] = jnp.where(z >= 0.0, z, NEG_SLOPE * z).astype(o_ref.dtype)


def bn_lrelu_apply(y, scale, shift, rows_tile, out_dtype):
    r, c = y.shape
    nt = r // rows_tile
    return pl.pallas_call(
        _bn_lrelu_kernel,
        out_shape=jax.ShapeDtypeStruct((r, c), out_dtype),
        grid=(nt,),
        in_specs=[
            pl.BlockSpec((rows_tile, c), lambda i: (i, 0)),
            pl.BlockSpec((1, c), lambda i: (0, 0)),
            pl.BlockSpec((1, c), lambda i: (0, 0)),
        ],
        out_specs=pl.BlockSpec((rows_tile, c), lambda i: (i, 0)),
        compiler_params=pltpu.CompilerParams(
            dimension_semantics=("parallel",),
            vmem_limit_bytes=VMEM_LIMIT,
        ),
    )(y, scale.reshape(1, c), shift.reshape(1, c))


# ----------------------------------------------------------------------------
# Wrapper glue (layout / packing / parameter prep).
# ----------------------------------------------------------------------------
def _pad_channels(a, target, axis=-1):
    amount = target - a.shape[axis]
    if amount <= 0:
        return a
    widths = [(0, 0)] * a.ndim
    widths[axis] = (0, amount)
    return jnp.pad(a, widths)


def _pick_rows_tile(r, target=1024):
    """Largest multiple-of-8 divisor of r that is <= target while leaving at
    least 2 grid steps (so v7x's two TensorCores both get work)."""
    best = None
    for t in range(8, r + 1, 8):
        if r % t:
            continue
        if r // t < 2:
            break
        if t <= target:
            best = t
    return best if best is not None else r


def _im2col_pack(x_nhwc, c_real, cpad=LANE):
    """(N,H,W,>=c_real) -> (N*H*W, cpad) bf16 patch rows.

    Packed-K index = (ky*3 + kx)*c_real + ci (must match conv_weight_pack).
    Pure layout gather; XLA fuses it with the pad/cast, and since 9*c_real <=
    128 it is no bigger in HBM than a lane-padded activation would be.
    """
    n, h, w = x_nhwc.shape[:3]
    x = x_nhwc[..., :c_real]
    xp = jnp.pad(x, ((0, 0), (1, 1), (1, 1), (0, 0)))
    taps = [xp[:, ky:ky + h, kx:kx + w, :] for ky in range(3) for kx in range(3)]
    p = jnp.concatenate(taps, axis=-1)                 # (N, H, W, 9*c_real)
    p = _pad_channels(p, cpad)                         # lane-dense 128
    return p.reshape(n * h * w, cpad).astype(jnp.bfloat16)


def conv_weight_pack(w_oihw, cpad=LANE):
    """PyTorch conv weight (Cout, Cin, 3, 3) -> (cpad, cpad) bf16 packed-K matrix."""
    cout, cin, kh, kw = w_oihw.shape
    assert kh == 3 and kw == 3
    assert kh * kw * cin <= cpad, "packed-K conv requires 9*Cin <= 128"
    # row index = (ky*3 + kx)*cin + ci  -> matches _im2col_pack ordering.
    w = jnp.transpose(w_oihw, (2, 3, 1, 0)).reshape(kh * kw * cin, cout)
    w = _pad_channels(w, cpad, axis=0)
    w = _pad_channels(w, cpad, axis=1)
    return w.astype(jnp.bfloat16)


def vgg_layer(x_nhwc, c_in_real, w_packed, gamma_pad, beta_pad, out_dtype, rows_tile):
    """One (conv3x3 -> BN(train, global stats) -> LeakyReLU) layer."""
    n, h, w = x_nhwc.shape[:3]
    cpad = w_packed.shape[-1]
    patches = _im2col_pack(x_nhwc, c_in_real, cpad)    # (R, 128) bf16
    y, stats = conv_with_stats(patches, w_packed, rows_tile)

    # Global training-mode batch statistics (biased variance) from f32 partials.
    totals = jnp.sum(stats, axis=0)                    # (2, Cpad)
    count = float(n * h * w)
    mean = totals[0] / count
    # E[x^2] - E[x]^2 in f32 (clamped); adequate for unit-scale activations.
    var = jnp.maximum(totals[1] / count - mean * mean, 0.0)
    inv_std = jax.lax.rsqrt(var + EPS)
    scale = gamma_pad * inv_std
    shift = beta_pad - mean * scale

    out = bn_lrelu_apply(y, scale, shift, rows_tile, out_dtype)   # (R, Cpad)
    return out.reshape(n, h, w, cpad)


def vgg_block_forward(x_nchw, params, cpad=LANE):
    """Mirrors VGGBlock.forward: (conv -> bn -> leaky_relu) x 3, training-mode BN."""
    n, cin, h, w = x_nchw.shape
    # conv3 is declared with in_channels=middle_channels but consumes conv2's
    # output, so the module is only well-defined when mid_ch == out_ch.
    assert params["conv3_w"].shape[1] == params["conv2_w"].shape[0]

    x = jnp.transpose(x_nchw, (0, 2, 3, 1))            # NCHW -> NHWC
    rows_tile = _pick_rows_tile(n * h * w)
    c_real = cin
    for i, name in enumerate(("1", "2", "3")):
        w_packed = conv_weight_pack(params[f"conv{name}_w"], cpad)
        gamma = _pad_channels(params[f"bn{name}_g"], cpad)
        beta = _pad_channels(params[f"bn{name}_b"], cpad)
        # Conv bias is intentionally NOT applied: train-mode BatchNorm's mean
        # subtraction cancels it exactly (checked against the f32 reference).
        out_dtype = jnp.float32 if i == 2 else jnp.bfloat16
        x = vgg_layer(x, c_real, w_packed, gamma, beta, out_dtype, rows_tile)
        c_real = params[f"conv{name}_w"].shape[0]
    x = x[..., :c_real]                                # drop channel padding
    return jnp.transpose(x, (0, 3, 1, 2))              # NHWC -> NCHW


# ----------------------------------------------------------------------------
# Pure f32 XLA reference of the original module (training-mode BN, with bias).
# ----------------------------------------------------------------------------
def _reference_forward(x, params):
    def layer(x, wgt, b, g, beta):
        y = jax.lax.conv_general_dilated(
            x, wgt, window_strides=(1, 1), padding=((1, 1), (1, 1)),
            dimension_numbers=("NCHW", "OIHW", "NCHW"),
            precision=jax.lax.Precision.HIGHEST)
        y = y + b[None, :, None, None]
        mean = jnp.mean(y, axis=(0, 2, 3), keepdims=True)
        var = jnp.var(y, axis=(0, 2, 3), keepdims=True)
        y = (y - mean) * jax.lax.rsqrt(var + EPS)
        y = y * g[None, :, None, None] + beta[None, :, None, None]
        return jnp.where(y >= 0, y, NEG_SLOPE * y)

    for name in ("1", "2", "3"):
        x = layer(x, params[f"conv{name}_w"], params[f"conv{name}_b"],
                  params[f"bn{name}_g"], params[f"bn{name}_b"])
    return x


if __name__ == "__main__":
    # The module's conv3 takes middle_channels as input but sees conv2's output
    # (out_channels), so the forward requires mid_ch == out_ch.
    in_ch, mid_ch, out_ch = 4, 8, 8
    N, H, W = 2, 16, 16

    key = jax.random.PRNGKey(0)
    keys = jax.random.split(key, 10)

    def conv_init(k, cout, cin):
        kw_, kb = jax.random.split(k)
        bound = 1.0 / jnp.sqrt(cin * 9.0)
        wgt = jax.random.uniform(kw_, (cout, cin, 3, 3), jnp.float32, -bound, bound)
        b = jax.random.uniform(kb, (cout,), jnp.float32, -bound, bound)
        return wgt, b

    params = {}
    params["conv1_w"], params["conv1_b"] = conv_init(keys[0], mid_ch, in_ch)
    params["conv2_w"], params["conv2_b"] = conv_init(keys[1], out_ch, mid_ch)
    params["conv3_w"], params["conv3_b"] = conv_init(keys[2], out_ch, mid_ch)
    for i, name in enumerate(("1", "2", "3")):
        c = mid_ch if name == "1" else out_ch
        params[f"bn{name}_g"] = 1.0 + 0.1 * jax.random.normal(keys[3 + i], (c,), jnp.float32)
        params[f"bn{name}_b"] = 0.1 * jax.random.normal(keys[6 + i], (c,), jnp.float32)

    x = jax.random.normal(keys[9], (N, in_ch, H, W), jnp.float32)

    out = jax.block_until_ready(jax.jit(vgg_block_forward)(x, params))
    assert out.shape == (N, out_ch, H, W)
    assert bool(jnp.all(jnp.isfinite(out)))

    # Numerical check vs f32 reference (bf16 operands/handoff => loose tolerance).
    ref = jax.block_until_ready(jax.jit(_reference_forward)(x, params))
    max_diff = float(jnp.max(jnp.abs(out - ref)))
    assert max_diff < 0.2, f"mismatch vs f32 reference: max |diff| = {max_diff}"

    print("KERNEL_OK")
</pallas_src>

<mosaic_0001>
module attributes {stable_mosaic.version = 11 : i64} {
  func.func @_conv_stats_kernel(%arg0: i32, %arg1: memref<256x128xbf16, #tpu.memory_space<vmem>>, %arg2: memref<128x128xbf16, #tpu.memory_space<vmem>>, %arg3: memref<256x128xbf16, #tpu.memory_space<vmem>>, %arg4: memref<1x2x128xf32, #tpu.memory_space<vmem>>) attributes {dimension_semantics = [#tpu.dimension_semantics<parallel>], iteration_bounds = array<i64: 2>, scalar_prefetch = 0 : i64, scratch_operands = 0 : i64, tpu.core_type = #tpu.core_type<tc>, window_params = [{transform_indices = @transform_0, window_bounds = array<i64: 256, 128>}, {pipeline_mode = #tpu.pipeline_mode<synchronous>, transform_indices = @transform_1, window_bounds = array<i64: 128, 128>}, {transform_indices = @transform_2, window_bounds = array<i64: 256, 128>}, {transform_indices = @transform_3, window_bounds = array<i64: 1, 2, 128>}]} {
    %c0 = arith.constant 0 : index
    %c0_0 = arith.constant 0 : index
    %0 = vector.load %arg1[%c0, %c0_0] : memref<256x128xbf16, #tpu.memory_space<vmem>>, vector<256x128xbf16>
    %c0_1 = arith.constant 0 : index
    %c0_2 = arith.constant 0 : index
    %1 = vector.load %arg2[%c0_1, %c0_2] : memref<128x128xbf16, #tpu.memory_space<vmem>>, vector<128x128xbf16>
    %cst = arith.constant dense<0.000000e+00> : vector<256x128xf32>
    %2 = tpu.matmul %0, %1, %cst {dimension_numbers = #tpu.dot_dimension_numbers<[1], [0], [0], [1], [0, 0, 1, 1], [], []>} : vector<256x128xbf16>, vector<128x128xbf16>, vector<256x128xf32> -> vector<256x128xf32>
    %3 = arith.truncf %2 : vector<256x128xf32> to vector<256x128xbf16>
    %c0_3 = arith.constant 0 : index
    %c0_4 = arith.constant 0 : index
    %4 = vector.load %arg3[%c0_3, %c0_4] : memref<256x128xbf16, #tpu.memory_space<vmem>>, vector<256x128xbf16>
    tpu.vector_store %arg3[%c0_3, %c0_4], %3 {strides = array<i32>} : memref<256x128xbf16, #tpu.memory_space<vmem>>, vector<256x128xbf16>,
    %cst_5 = arith.constant dense<0.000000e+00> : vector<128xf32>
    %5 = vector.multi_reduction <add>, %2, %cst_5 [0] : vector<256x128xf32> to vector<128xf32>
    %6 = vector.shape_cast %5 : vector<128xf32> to vector<1x128xf32>
    %7 = arith.mulf %2, %2 : vector<256x128xf32>
    %cst_6 = arith.constant dense<0.000000e+00> : vector<128xf32>
    %8 = vector.multi_reduction <add>, %7, %cst_6 [0] : vector<256x128xf32> to vector<128xf32>
    %9 = vector.shape_cast %8 : vector<128xf32> to vector<1x128xf32>
    %10 = tpu.concatenate %6, %9 in 0 : vector<1x128xf32>, vector<1x128xf32> -> vector<2x128xf32>
    %c0_7 = arith.constant 0 : index
    %c0_8 = arith.constant 0 : index
    %c0_9 = arith.constant 0 : index
    %11 = vector.load %arg4[%c0_7, %c0_8, %c0_9] : memref<1x2x128xf32, #tpu.memory_space<vmem>>, vector<1x2x128xf32>
    %12 = vector.shape_cast %11 : vector<1x2x128xf32> to vector<2x128xf32>
    %13 = vector.shape_cast %10 : vector<2x128xf32> to vector<1x2x128xf32>
    tpu.vector_store %arg4[%c0_7, %c0_8, %c0_9], %13 {strides = array<i32>} : memref<1x2x128xf32, #tpu.memory_space<vmem>>, vector<1x2x128xf32>,
    return
  }
  func.func @transform_0(%arg0: i32) -> (i32, i32) {
    %c0_i32 = arith.constant 0 : i32
    %c0_i32_0 = arith.constant 0 : i32
    return %arg0, %c0_i32 : i32, i32
  }
  func.func @transform_1(%arg0: i32) -> (i32, i32) {
    %c0_i32 = arith.constant 0 : i32
    %c0_i32_0 = arith.constant 0 : i32
    %c0_i32_1 = arith.constant 0 : i32
    return %c0_i32, %c0_i32_0 : i32, i32
  }
  func.func @transform_2(%arg0: i32) -> (i32, i32) {
    %c0_i32 = arith.constant 0 : i32
    %c0_i32_0 = arith.constant 0 : i32
    return %arg0, %c0_i32 : i32, i32
  }
  func.func @transform_3(%arg0: i32) -> (i32, i32, i32) {
    %c0_i32 = arith.constant 0 : i32
    %c0_i32_0 = arith.constant 0 : i32
    %c0_i32_1 = arith.constant 0 : i32
    return %arg0, %c0_i32, %c0_i32_0 : i32, i32, i32
  }
}

module attributes {stable_mosaic.version = 11 : i64} {
  func.func @_bn_lrelu_kernel(%arg0: i32, %arg1: memref<256x128xbf16, #tpu.memory_space<vmem>>, %arg2: memref<1x128xf32, #tpu.memory_space<vmem>>, %arg3: memref<1x128xf32, #tpu.memory_space<vmem>>, %arg4: memref<256x128xbf16, #tpu.memory_space<vmem>>) attributes {dimension_semantics = [#tpu.dimension_semantics<parallel>], iteration_bounds = array<i64: 2>, scalar_prefetch = 0 : i64, scratch_operands = 0 : i64, tpu.core_type = #tpu.core_type<tc>, window_params = [{transform_indices = @transform_0, window_bounds = array<i64: 256, 128>}, {pipeline_mode = #tpu.pipeline_mode<synchronous>, transform_indices = @transform_1, window_bounds = array<i64: 1, 128>}, {pipeline_mode = #tpu.pipeline_mode<synchronous>, transform_indices = @transform_2, window_bounds = array<i64: 1, 128>}, {transform_indices = @transform_3, window_bounds = array<i64: 256, 128>}]} {
    %c0 = arith.constant 0 : index
    %c0_0 = arith.constant 0 : index
    %0 = vector.load %arg1[%c0, %c0_0] : memref<256x128xbf16, #tpu.memory_space<vmem>>, vector<256x128xbf16>
    %1 = arith.extf %0 : vector<256x128xbf16> to vector<256x128xf32>
    %c0_1 = arith.constant 0 : index
    %c0_2 = arith.constant 0 : index
    %2 = vector.load %arg2[%c0_1, %c0_2] : memref<1x128xf32, #tpu.memory_space<vmem>>, vector<1x128xf32>
    %3 = vector.broadcast %2 : vector<1x128xf32> to vector<256x128xf32>
    %4 = arith.mulf %1, %3 : vector<256x128xf32>
    %c0_3 = arith.constant 0 : index
    %c0_4 = arith.constant 0 : index
    %5 = vector.load %arg3[%c0_3, %c0_4] : memref<1x128xf32, #tpu.memory_space<vmem>>, vector<1x128xf32>
    %6 = vector.broadcast %5 : vector<1x128xf32> to vector<256x128xf32>
    %7 = arith.addf %4, %6 : vector<256x128xf32>
    %cst = arith.constant 0.000000e+00 : f32
    %8 = vector.broadcast %cst : f32 to vector<256x128xf32>
    %9 = arith.cmpf oge, %7, %8 : vector<256x128xf32>
    %cst_5 = arith.constant 0.00999999977 : f32
    %10 = vector.broadcast %cst_5 : f32 to vector<256x128xf32>
    %11 = arith.mulf %10, %7 : vector<256x128xf32>
    %12 = arith.select %9, %7, %11 : vector<256x128xi1>, vector<256x128xf32>
    %13 = arith.truncf %12 : vector<256x128xf32> to vector<256x128xbf16>
    %c0_6 = arith.constant 0 : index
    %c0_7 = arith.constant 0 : index
    %14 = vector.load %arg4[%c0_6, %c0_7] : memref<256x128xbf16, #tpu.memory_space<vmem>>, vector<256x128xbf16>
    tpu.vector_store %arg4[%c0_6, %c0_7], %13 {strides = array<i32>} : memref<256x128xbf16, #tpu.memory_space<vmem>>, vector<256x128xbf16>,
    return
  }
  func.func @transform_0(%arg0: i32) -> (i32, i32) {
    %c0_i32 = arith.constant 0 : i32
    %c0_i32_0 = arith.constant 0 : i32
    return %arg0, %c0_i32 : i32, i32
  }
  func.func @transform_1(%arg0: i32) -> (i32, i32) {
    %c0_i32 = arith.constant 0 : i32
    %c0_i32_0 = arith.constant 0 : i32
    %c0_i32_1 = arith.constant 0 : i32
    return %c0_i32, %c0_i32_0 : i32, i32
  }
  func.func @transform_2(%arg0: i32) -> (i32, i32) {
    %c0_i32 = arith.constant 0 : i32
    %c0_i32_0 = arith.constant 0 : i32
    %c0_i32_1 = arith.constant 0 : i32
    return %c0_i32, %c0_i32_0 : i32, i32
  }
  func.func @transform_3(%arg0: i32) -> (i32, i32) {
    %c0_i32 = arith.constant 0 : i32
    %c0_i32_0 = arith.constant 0 : i32
    return %arg0, %c0_i32 : i32, i32
  }
}

module attributes {stable_mosaic.version = 11 : i64} {
  func.func @_bn_lrelu_kernel(%arg0: i32, %arg1: memref<256x128xbf16, #tpu.memory_space<vmem>>, %arg2: memref<1x128xf32, #tpu.memory_space<vmem>>, %arg3: memref<1x128xf32, #tpu.memory_space<vmem>>, %arg4: memref<256x128xf32, #tpu.memory_space<vmem>>) attributes {dimension_semantics = [#tpu.dimension_semantics<parallel>], iteration_bounds = array<i64: 2>, scalar_prefetch = 0 : i64, scratch_operands = 0 : i64, tpu.core_type = #tpu.core_type<tc>, window_params = [{transform_indices = @transform_0, window_bounds = array<i64: 256, 128>}, {pipeline_mode = #tpu.pipeline_mode<synchronous>, transform_indices = @transform_1, window_bounds = array<i64: 1, 128>}, {pipeline_mode = #tpu.pipeline_mode<synchronous>, transform_indices = @transform_2, window_bounds = array<i64: 1, 128>}, {transform_indices = @transform_3, window_bounds = array<i64: 256, 128>}]} {
    %c0 = arith.constant 0 : index
    %c0_0 = arith.constant 0 : index
    %0 = vector.load %arg1[%c0, %c0_0] : memref<256x128xbf16, #tpu.memory_space<vmem>>, vector<256x128xbf16>
    %1 = arith.extf %0 : vector<256x128xbf16> to vector<256x128xf32>
    %c0_1 = arith.constant 0 : index
    %c0_2 = arith.constant 0 : index
    %2 = vector.load %arg2[%c0_1, %c0_2] : memref<1x128xf32, #tpu.memory_space<vmem>>, vector<1x128xf32>
    %3 = vector.broadcast %2 : vector<1x128xf32> to vector<256x128xf32>
    %4 = arith.mulf %1, %3 : vector<256x128xf32>
    %c0_3 = arith.constant 0 : index
    %c0_4 = arith.constant 0 : index
    %5 = vector.load %arg3[%c0_3, %c0_4] : memref<1x128xf32, #tpu.memory_space<vmem>>, vector<1x128xf32>
    %6 = vector.broadcast %5 : vector<1x128xf32> to vector<256x128xf32>
    %7 = arith.addf %4, %6 : vector<256x128xf32>
    %cst = arith.constant 0.000000e+00 : f32
    %8 = vector.broadcast %cst : f32 to vector<256x128xf32>
    %9 = arith.cmpf oge, %7, %8 : vector<256x128xf32>
    %cst_5 = arith.constant 0.00999999977 : f32
    %10 = vector.broadcast %cst_5 : f32 to vector<256x128xf32>
    %11 = arith.mulf %10, %7 : vector<256x128xf32>
    %12 = arith.select %9, %7, %11 : vector<256x128xi1>, vector<256x128xf32>
    %c0_6 = arith.constant 0 : index
    %c0_7 = arith.constant 0 : index
    %13 = vector.load %arg4[%c0_6, %c0_7] : memref<256x128xf32, #tpu.memory_space<vmem>>, vector<256x128xf32>
    tpu.vector_store %arg4[%c0_6, %c0_7], %12 {strides = array<i32>} : memref<256x128xf32, #tpu.memory_space<vmem>>, vector<256x128xf32>,
    return
  }
  func.func @transform_0(%arg0: i32) -> (i32, i32) {
    %c0_i32 = arith.constant 0 : i32
    %c0_i32_0 = arith.constant 0 : i32
    return %arg0, %c0_i32 : i32, i32
  }
  func.func @transform_1(%arg0: i32) -> (i32, i32) {
    %c0_i32 = arith.constant 0 : i32
    %c0_i32_0 = arith.constant 0 : i32
    %c0_i32_1 = arith.constant 0 : i32
    return %c0_i32, %c0_i32_0 : i32, i32
  }
  func.func @transform_2(%arg0: i32) -> (i32, i32) {
    %c0_i32 = arith.constant 0 : i32
    %c0_i32_0 = arith.constant 0 : i32
    %c0_i32_1 = arith.constant 0 : i32
    return %c0_i32, %c0_i32_0 : i32, i32
  }
  func.func @transform_3(%arg0: i32) -> (i32, i32) {
    %c0_i32 = arith.constant 0 : i32
    %c0_i32_0 = arith.constant 0 : i32
    return %arg0, %c0_i32 : i32, i32
  }
}

</mosaic_0001>

<llo_original>
// kernel: vgg_block_forward.7
$region0: #{vgg_block_forward.7}
  #allocation0 [shape = 'u32[]', space=smem, size = 0x4, offset = 0x4, fixed_abs, tag = 'smem constant byte address 0x4 - core index']
  #allocation1 [shape = 'u32[144,128]{1,0:T(1,128)}', space=vmem, size = 0x12000, scoped, tag = 'internal scratch']
  %s0 = inlined_call_operand.vmem [shape: bf16[512,128], index: 0, kind: input, shape index: {}]
  %s1 = inlined_call_operand.vmem [shape: f32[1,128], index: 1, kind: input, shape index: {}]
  %s2 = inlined_call_operand.vmem [shape: f32[1,128], index: 2, kind: input, shape index: {}]
  %s3 = inlined_call_operand.vmem [shape: bf16[512,128], index: 3, kind: output, shape index: {}]
  %s4 = sld [smem:[#allocation0]]
  $region45: #{vgg_block_forward.7} parent=0
    _
  %s6 = ssub.s32 1, %s4
  %s7 = scalar_select 0, %s6, %s4
  loop: start=0, step=1, limit=4
  $region2: #{vgg_block_forward.7} parent=0 // loop_pre_header
    _
  $region3: #{vgg_block_forward.7} parent=0 // loop_header
    %s9 = sphi 0, %s13
    %p10 = scmp.ge.s32.totalorder %s9, 4
    %s19 = sphi 0, %s21
    %s22 = sphi 0, %s19
    %s23 = sphi 0, %s22
    %s39 = sphi 0, %s23
    %s43 = sphi 0, %s43
    %s45 = sphi 0, %s43
    %s46 = sphi 0, %s45
    %s60 = sphi 0, %s46
    %s64 = sphi 0, %s64
    %s66 = sphi 0, %s64
    %s67 = sphi 0, %s66
    %s81 = sphi 0, %s67
    %s87 = sphi 0, %s89
    %s90 = sphi 0, %s87
    %s91 = sphi 0, %s90
    %s107 = sphi 0, %s91
  $region4: #{vgg_block_forward.7} parent=0 // loop_header_branch
    %12 = sbr.rel (%p10) target = $region8
  $region5: #{vgg_block_forward.7} parent=0 // loop_body
    %s14 = ssub.s32 %s9, 1
    %s15 = ssub.s32 %s9, 2
    %s16 = sadd.s32 %s9, 1
    %s17 = ssub.s32 %s9, %s16
    %p18 = scmp.eq.s32.totalorder %s17, 0
    %s20 = sadd.s32 %s19, 1
    %s21 = scalar_select %p18, %s19, %s20
    %p24 = pneg %p18
    %p25 = scmp.eq.s32.totalorder %s9, 1
    %p26 = por %p24, %p25
    %p27 = scmp.ne.s32.totalorder %s19, %s22
    %p28 = scmp.eq.s32.totalorder %s9, 0
    %p29 = por %p27, %p28
    %p30 = scmp.ne.s32.totalorder %s19, %s22
    %p31 = scmp.eq.s32.totalorder %s14, 1
    %p32 = por %p30, %p31
    %p33 = scmp.ne.s32.totalorder %s22, %s23
    %p34 = scmp.eq.s32.totalorder %s14, 0
    %p35 = por %p33, %p34
    %p36 = scmp.ne.s32.totalorder %s22, %s23
    %p37 = scmp.eq.s32.totalorder %s15, 1
    %p38 = por %p36, %p37
    %p40 = scmp.ne.s32.totalorder %s23, %s39
    %p41 = scmp.eq.s32.totalorder %s15, 0
    %p42 = por %p40, %p41
    %s44 = sadd.s32 %s43, 1
    %p47 = scmp.eq.s32.totalorder %s9, 1
    %p48 = scmp.ne.s32.totalorder %s43, %s45
    %p49 = scmp.eq.s32.totalorder %s9, 0
    %p50 = por %p48, %p49
    %p51 = scmp.ne.s32.totalorder %s43, %s45
    %p52 = scmp.eq.s32.totalorder %s14, 1
    %p53 = por %p51, %p52
    %p54 = scmp.ne.s32.totalorder %s45, %s46
    %p55 = scmp.eq.s32.totalorder %s14, 0
    %p56 = por %p54, %p55
    %p57 = scmp.ne.s32.totalorder %s45, %s46
    %p58 = scmp.eq.s32.totalorder %s15, 1
    %p59 = por %p57, %p58
    %p61 = scmp.ne.s32.totalorder %s46, %s60
    %p62 = scmp.eq.s32.totalorder %s15, 0
    %p63 = por %p61, %p62
    %s65 = sadd.s32 %s64, 1
    %p68 = scmp.eq.s32.totalorder %s9, 1
    %p69 = scmp.ne.s32.totalorder %s64, %s66
    %p70 = scmp.eq.s32.totalorder %s9, 0
    %p71 = por %p69, %p70
    %p72 = scmp.ne.s32.totalorder %s64, %s66
    %p73 = scmp.eq.s32.totalorder %s14, 1
    %p74 = por %p72, %p73
    %p75 = scmp.ne.s32.totalorder %s66, %s67
    %p76 = scmp.eq.s32.totalorder %s14, 0
    %p77 = por %p75, %p76
    %p78 = scmp.ne.s32.totalorder %s66, %s67
    %p79 = scmp.eq.s32.totalorder %s15, 1
    %p80 = por %p78, %p79
    %p82 = scmp.ne.s32.totalorder %s67, %s81
    %p83 = scmp.eq.s32.totalorder %s15, 0
    %p84 = por %p82, %p83
    %s85 = ssub.s32 %s9, %s16
    %p86 = scmp.eq.s32.totalorder %s85, 0
    %s88 = sadd.s32 %s87, 1
    %s89 = scalar_select %p86, %s87, %s88
    %p92 = pneg %p86
    %p93 = scmp.eq.s32.totalorder %s9, 1
    %p94 = por %p92, %p93
    %p95 = scmp.ne.s32.totalorder %s87, %s90
    %p96 = scmp.eq.s32.totalorder %s9, 0
    %p97 = por %p95, %p96
    %p98 = scmp.ne.s32.totalorder %s87, %s90
    %p99 = scmp.eq.s32.totalorder %s14, 1
    %p100 = por %p98, %p99
    %p101 = scmp.ne.s32.totalorder %s90, %s91
    %p102 = scmp.eq.s32.totalorder %s14, 0
    %p103 = por %p101, %p102
    %p104 = scmp.ne.s32.totalorder %s90, %s91
    %p105 = scmp.eq.s32.totalorder %s15, 1
    %p106 = por %p104, %p105
    %p108 = scmp.ne.s32.totalorder %s91, %s107
    %p109 = scmp.eq.s32.totalorder %s15, 0
    %p110 = por %p108, %p109
    %p111 = scmp.le.s32.totalorder 1, %s9
    %p112 = scmp.lt.s32.totalorder %s9, 3
    %p113 = pnand %p111, %p112
    %p114 = pneg %p113
    // Predicated region
    $region9: #{vgg_block_forward.7} parent=5 // pred_check
      _
    $region10: #{vgg_block_forward.7} parent=5 // pred_check_branch
      %116 = sbr.rel (%p113) target = $region12
    $region11: #{vgg_block_forward.7} parent=5 // pred_region
      %s117 = ssub.s32 %s9, 1
      // Predicated region
      $region13: #{vgg_block_forward.7} parent=11 // pred_check
        %p118 = pneg %p56
      $region14: #{vgg_block_forward.7} parent=11 // pred_check_branch
        %120 = sbr.rel (%p118) target = $region16
      $region15: #{vgg_block_forward.7} parent=11 // pred_region
        _
      $region16: #{vgg_block_forward.7} parent=11 // pred_fallthru
        _
      // Predicated region
      $region17: #{vgg_block_forward.7} parent=11 // pred_check
        %p121 = pneg %p77
      $region18: #{vgg_block_forward.7} parent=11 // pred_check_branch
        %123 = sbr.rel (%p121) target = $region20
      $region19: #{vgg_block_forward.7} parent=11 // pred_region
        _
      $region20: #{vgg_block_forward.7} parent=11 // pred_fallthru
        _
    $region12: #{vgg_block_forward.7} parent=5 // pred_fallthru
      _
    %p124 = scmp.lt.s32.totalorder %s9, 2
    // Predicated region
    $region21: #{vgg_block_forward.7} parent=5 // pred_check
      %p125 = pneg %p124
    $region22: #{vgg_block_forward.7} parent=5 // pred_check_branch
      %127 = sbr.rel (%p125) target = $region24
    $region23: #{vgg_block_forward.7} parent=5 // pred_region
      // Predicated region
      $region25: #{vgg_block_forward.7} parent=23 // pred_check
        %p128 = pneg %p29
      $region26: #{vgg_block_forward.7} parent=23 // pred_check_branch
        %130 = sbr.rel (%p128) target = $region28
      $region27: #{vgg_block_forward.7} parent=23 // pred_region
        %s131 = smul.u32 32, %s9
        %p132 = scmp.lt.s32.totalorder %s131, 63
        %s133 = scalar_select %p132, %s131, 63
        %s134 = smul.addr %s133, 4
        %s135 = scalar_lea.vmem %s0, %s134
        %s136 = smul.u32 32, %s9
      $region28: #{vgg_block_forward.7} parent=23 // pred_fallthru
        _
    $region24: #{vgg_block_forward.7} parent=5 // pred_fallthru
      _
    %p137 = scmp.le.s32.totalorder 1, %s9
    %p138 = scmp.lt.s32.totalorder %s9, 3
    %p139 = pnand %p137, %p138
    %p140 = pneg %p139
    // Predicated region
    $region29: #{vgg_block_forward.7} parent=5 // pred_check
      _
    $region30: #{vgg_block_forward.7} parent=5 // pred_check_branch
      %142 = sbr.rel (%p139) target = $region32
    $region31: #{vgg_block_forward.7} parent=5 // pred_region
      %s143 = ssub.s32 %s9, 1
      %s144 = smul.u32 32, %s14
      %p145 = scmp.lt.s32.totalorder %s144, 63
      %s146 = scalar_select %p145, %s144, 63
      %s147 = smul.addr %s146, 4
      %s148 = scalar_lea.vmem %s0, %s147
      %p149 = pneg %p35
      %p150 = pneg %p32
      %p151 = pneg %p56
      %p152 = pneg %p53
      %p153 = pneg %p77
      %p154 = pneg %p74
      %p155 = pneg %p103
      %p156 = pneg %p100
      %s157 = smul.u32 32, %s14
      %p158 = scmp.lt.s32.totalorder %s157, 63
      %s159 = scalar_select %p158, %s157, 63
      %s160 = smul.addr %s159, 4
      %s161 = scalar_lea.vmem %s3, %s160
      %s162 = smul.u32 32, %s14
      %p163 = scmp.lt.s32.totalorder %s162, 63
      %s164 = scalar_select %p163, %s162, 63
      %s165 = smul.addr %s164, 4
      %s166 = scalar_lea.vmem %s0, %s165
      %s167 = smul.u32 32, %s14
      %s168 = smul.u32 32, %s14
      %p169 = scmp.lt.s32.totalorder %s168, 63
      %s170 = scalar_select %p169, %s168, 63
      %s171 = smul.addr %s170, 4
      %s172 = scalar_lea.vmem %s3, %s171
      %s173 = smul.u32 32, %s14
      %v174 = vld [vmem:[%s166] sm:$0xf]
      %v175 = vld [vmem:[%s166 + $0x4] sm:$0xf]
      %v176 = vld [vmem:[%s166 + $0x8] sm:$0xf]
      %v177 = vld [vmem:[%s166 + $0xc] sm:$0xf]
      %v178 = vld [vmem:[%s166 + $0x10] sm:$0xf]
      %v179 = vld [vmem:[%s166 + $0x14] sm:$0xf]
      %v180 = vld [vmem:[%s166 + $0x18] sm:$0xf]
      %v181 = vld [vmem:[%s166 + $0x1c] sm:$0xf]
      %v182 = vld [vmem:[%s166 + $0x20] sm:$0xf]
      %v183 = vld [vmem:[%s166 + $0x24] sm:$0xf]
      %v184 = vld [vmem:[%s166 + $0x28] sm:$0xf]
      %v185 = vld [vmem:[%s166 + $0x2c] sm:$0xf]
      %v186 = vld [vmem:[%s166 + $0x30] sm:$0xf]
      %v187 = vld [vmem:[%s166 + $0x34] sm:$0xf]
      %v188 = vld [vmem:[%s166 + $0x38] sm:$0xf]
      %v189 = vld [vmem:[%s166 + $0x3c] sm:$0xf]
      %v190 = vld [vmem:[%s166 + $0x40] sm:$0xf]
      %v191 = vld [vmem:[%s166 + $0x44] sm:$0xf]
      %v192 = vld [vmem:[%s166 + $0x48] sm:$0xf]
      %v193 = vld [vmem:[%s166 + $0x4c] sm:$0xf]
      %v194 = vld [vmem:[%s166 + $0x50] sm:$0xf]
      %v195 = vld [vmem:[%s166 + $0x54] sm:$0xf]
      %v196 = vld [vmem:[%s166 + $0x58] sm:$0xf]
      %v197 = vld [vmem:[%s166 + $0x5c] sm:$0xf]
      %v198 = vld [vmem:[%s166 + $0x60] sm:$0xf]
      %v199 = vld [vmem:[%s166 + $0x64] sm:$0xf]
      %v200 = vld [vmem:[%s166 + $0x68] sm:$0xf]
      %v201 = vld [vmem:[%s166 + $0x6c] sm:$0xf]
      %v202 = vld [vmem:[%s166 + $0x70] sm:$0xf]
      %v203 = vld [vmem:[%s166 + $0x74] sm:$0xf]
      %v204 = vld [vmem:[%s166 + $0x78] sm:$0xf]
      %v205 = vld [vmem:[%s166 + $0x7c] sm:$0xf]
      %v206 = vunpack.c.l.bf16 %v174
      %v207 = vunpack.c.l.bf16 %v175
      %v208 = vunpack.c.l.bf16 %v176
      %v209 = vunpack.c.l.bf16 %v177
      %v210 = vunpack.c.l.bf16 %v178
      %v211 = vunpack.c.l.bf16 %v179
      %v212 = vunpack.c.l.bf16 %v180
      %v213 = vunpack.c.l.bf16 %v181
      %v214 = vunpack.c.l.bf16 %v182
      %v215 = vunpack.c.l.bf16 %v183
      %v216 = vunpack.c.l.bf16 %v184
      %v217 = vunpack.c.l.bf16 %v185
      %v218 = vunpack.c.l.bf16 %v186
      %v219 = vunpack.c.l.bf16 %v187
      %v220 = vunpack.c.l.bf16 %v188
      %v221 = vunpack.c.l.bf16 %v189
      %v222 = vunpack.c.l.bf16 %v190
      %v223 = vunpack.c.l.bf16 %v191
      %v224 = vunpack.c.l.bf16 %v192
      %v225 = vunpack.c.l.bf16 %v193
      %v226 = vunpack.c.l.bf16 %v194
      %v227 = vunpack.c.l.bf16 %v195
      %v228 = vunpack.c.l.bf16 %v196
      %v229 = vunpack.c.l.bf16 %v197
      %v230 = vunpack.c.l.bf16 %v198
      %v231 = vunpack.c.l.bf16 %v199
      %v232 = vunpack.c.l.bf16 %v200
      %v233 = vunpack.c.l.bf16 %v201
      %v234 = vunpack.c.l.bf16 %v202
      %v235 = vunpack.c.l.bf16 %v203
      %v236 = vunpack.c.l.bf16 %v204
      %v237 = vunpack.c.l.bf16 %v205
      %v238 = vld [vmem:[%s1] sm:$0x1]
      %v240 = vlaneseq
      %v241 = vshrl.u32 %v240, 7
      %v242 = vsub.s32 0, %v241
      %v243 = vrot.slane %v238, %v242
      %v245 = vmul.f32 %v206, %v243
      %v246 = vmul.f32 %v207, %v243
      %v247 = vmul.f32 %v208, %v243
      %v248 = vmul.f32 %v209, %v243
      %v249 = vmul.f32 %v210, %v243
      %v250 = vmul.f32 %v211, %v243
      %v251 = vmul.f32 %v212, %v243
      %v252 = vmul.f32 %v213, %v243
      %v253 = vmul.f32 %v214, %v243
      %v254 = vmul.f32 %v215, %v243
      %v255 = vmul.f32 %v216, %v243
      %v256 = vmul.f32 %v217, %v243
      %v257 = vmul.f32 %v218, %v243
      %v258 = vmul.f32 %v219, %v243
      %v259 = vmul.f32 %v220, %v243
      %v260 = vmul.f32 %v221, %v243
      %v261 = vmul.f32 %v222, %v243
      %v262 = vmul.f32 %v223, %v243
      %v263 = vmul.f32 %v224, %v243
      %v264 = vmul.f32 %v225, %v243
      %v265 = vmul.f32 %v226, %v243
      %v266 = vmul.f32 %v227, %v243
      %v267 = vmul.f32 %v228, %v243
      %v268 = vmul.f32 %v229, %v243
      %v269 = vmul.f32 %v230, %v243
      %v270 = vmul.f32 %v231, %v243
      %v271 = vmul.f32 %v232, %v243
      %v272 = vmul.f32 %v233, %v243
      %v273 = vmul.f32 %v234, %v243
      %v274 = vmul.f32 %v235, %v243
      %v275 = vmul.f32 %v236, %v243
      %v276 = vmul.f32 %v237, %v243
      %v277 = vld [vmem:[%s2] sm:$0x1]
      %v279 = vlaneseq
      %v280 = vshrl.u32 %v279, 7
      %v281 = vsub.s32 0, %v280
      %v282 = vrot.slane %v277, %v281
      %v284 = vadd.f32 %v245, %v282
      %v285 = vadd.f32 %v246, %v282
      %v286 = vadd.f32 %v247, %v282
      %v287 = vadd.f32 %v248, %v282
      %v288 = vadd.f32 %v249, %v282
      %v289 = vadd.f32 %v250, %v282
      %v290 = vadd.f32 %v251, %v282
      %v291 = vadd.f32 %v252, %v282
      %v292 = vadd.f32 %v253, %v282
      %v293 = vadd.f32 %v254, %v282
      %v294 = vadd.f32 %v255, %v282
      %v295 = vadd.f32 %v256, %v282
      %v296 = vadd.f32 %v257, %v282
      %v297 = vadd.f32 %v258, %v282
      %v298 = vadd.f32 %v259, %v282
      %v299 = vadd.f32 %v260, %v282
      %v300 = vadd.f32 %v261, %v282
      %v301 = vadd.f32 %v262, %v282
      %v302 = vadd.f32 %v263, %v282
      %v303 = vadd.f32 %v264, %v282
      %v304 = vadd.f32 %v265, %v282
      %v305 = vadd.f32 %v266, %v282
      %v306 = vadd.f32 %v267, %v282
      %v307 = vadd.f32 %v268, %v282
      %v308 = vadd.f32 %v269, %v282
      %v309 = vadd.f32 %v270, %v282
      %v310 = vadd.f32 %v271, %v282
      %v311 = vadd.f32 %v272, %v282
      %v312 = vadd.f32 %v273, %v282
      %v313 = vadd.f32 %v274, %v282
      %v314 = vadd.f32 %v275, %v282
      %v315 = vadd.f32 %v276, %v282
      %vm316 = vcmp.ge.f32.partialorder %v284, 0.0
      %vm317 = vcmp.ge.f32.partialorder %v285, 0.0
      %vm318 = vcmp.ge.f32.partialorder %v286, 0.0
      %vm319 = vcmp.ge.f32.partialorder %v287, 0.0
      %vm320 = vcmp.ge.f32.partialorder %v288, 0.0
      %vm321 = vcmp.ge.f32.partialorder %v289, 0.0
      %vm322 = vcmp.ge.f32.partialorder %v290, 0.0
      %vm323 = vcmp.ge.f32.partialorder %v291, 0.0
      %vm324 = vcmp.ge.f32.partialorder %v292, 0.0
      %vm325 = vcmp.ge.f32.partialorder %v293, 0.0
      %vm326 = vcmp.ge.f32.partialorder %v294, 0.0
      %vm327 = vcmp.ge.f32.partialorder %v295, 0.0
      %vm328 = vcmp.ge.f32.partialorder %v296, 0.0
      %vm329 = vcmp.ge.f32.partialorder %v297, 0.0
      %vm330 = vcmp.ge.f32.partialorder %v298, 0.0
      %vm331 = vcmp.ge.f32.partialorder %v299, 0.0
      %vm332 = vcmp.ge.f32.partialorder %v300, 0.0
      %vm333 = vcmp.ge.f32.partialorder %v301, 0.0
      %vm334 = vcmp.ge.f32.partialorder %v302, 0.0
      %vm335 = vcmp.ge.f32.partialorder %v303, 0.0
      %vm336 = vcmp.ge.f32.partialorder %v304, 0.0
      %vm337 = vcmp.ge.f32.partialorder %v305, 0.0
      %vm338 = vcmp.ge.f32.partialorder %v306, 0.0
      %vm339 = vcmp.ge.f32.partialorder %v307, 0.0
      %vm340 = vcmp.ge.f32.partialorder %v308, 0.0
      %vm341 = vcmp.ge.f32.partialorder %v309, 0.0
      %vm342 = vcmp.ge.f32.partialorder %v310, 0.0
      %vm343 = vcmp.ge.f32.partialorder %v311, 0.0
      %vm344 = vcmp.ge.f32.partialorder %v312, 0.0
      %vm345 = vcmp.ge.f32.partialorder %v313, 0.0
      %vm346 = vcmp.ge.f32.partialorder %v314, 0.0
      %vm347 = vcmp.ge.f32.partialorder %v315, 0.0
      %v348 = vmul.f32 %v284, 0.01
      %v349 = vmul.f32 %v285, 0.01
      %v350 = vmul.f32 %v286, 0.01
      %v351 = vmul.f32 %v287, 0.01
      %v352 = vmul.f32 %v288, 0.01
      %v353 = vmul.f32 %v289, 0.01
      %v354 = vmul.f32 %v290, 0.01
      %v355 = vmul.f32 %v291, 0.01
      %v356 = vmul.f32 %v292, 0.01
      %v357 = vmul.f32 %v293, 0.01
      %v358 = vmul.f32 %v294, 0.01
      %v359 = vmul.f32 %v295, 0.01
      %v360 = vmul.f32 %v296, 0.01
      %v361 = vmul.f32 %v297, 0.01
      %v362 = vmul.f32 %v298, 0.01
      %v363 = vmul.f32 %v299, 0.01
      %v364 = vmul.f32 %v300, 0.01
      %v365 = vmul.f32 %v301, 0.01
      %v366 = vmul.f32 %v302, 0.01
      %v367 = vmul.f32 %v303, 0.01
      %v368 = vmul.f32 %v304, 0.01
      %v369 = vmul.f32 %v305, 0.01
      %v370 = vmul.f32 %v306, 0.01
      %v371 = vmul.f32 %v307, 0.01
      %v372 = vmul.f32 %v308, 0.01
      %v373 = vmul.f32 %v309, 0.01
      %v374 = vmul.f32 %v310, 0.01
      %v375 = vmul.f32 %v311, 0.01
      %v376 = vmul.f32 %v312, 0.01
      %v377 = vmul.f32 %v313, 0.01
      %v378 = vmul.f32 %v314, 0.01
      %v379 = vmul.f32 %v315, 0.01
      %v380 = vsel %vm316, %v284, %v348
      %v381 = vsel %vm317, %v285, %v349
      %v382 = vsel %vm318, %v286, %v350
      %v383 = vsel %vm319, %v287, %v351
      %v384 = vsel %vm320, %v288, %v352
      %v385 = vsel %vm321, %v289, %v353
      %v386 = vsel %vm322, %v290, %v354
      %v387 = vsel %vm323, %v291, %v355
      %v388 = vsel %vm324, %v292, %v356
      %v389 = vsel %vm325, %v293, %v357
      %v390 = vsel %vm326, %v294, %v358
      %v391 = vsel %vm327, %v295, %v359
      %v392 = vsel %vm328, %v296, %v360
      %v393 = vsel %vm329, %v297, %v361
      %v394 = vsel %vm330, %v298, %v362
      %v395 = vsel %vm331, %v299, %v363
      %v396 = vsel %vm332, %v300, %v364
      %v397 = vsel %vm333, %v301, %v365
      %v398 = vsel %vm334, %v302, %v366
      %v399 = vsel %vm335, %v303, %v367
      %v400 = vsel %vm336, %v304, %v368
      %v401 = vsel %vm337, %v305, %v369
      %v402 = vsel %vm338, %v306, %v370
      %v403 = vsel %vm339, %v307, %v371
      %v404 = vsel %vm340, %v308, %v372
      %v405 = vsel %vm341, %v309, %v373
      %v406 = vsel %vm342, %v310, %v374
      %v407 = vsel %vm343, %v311, %v375
      %v408 = vsel %vm344, %v312, %v376
      %v409 = vsel %vm345, %v313, %v377
      %v410 = vsel %vm346, %v314, %v378
      %v411 = vsel %vm347, %v315, %v379
      %v412 = vpack.c.bf16 %v381, %v380
      %v413 = vpack.c.bf16 %v383, %v382
      %v414 = vpack.c.bf16 %v385, %v384
      %v415 = vpack.c.bf16 %v387, %v386
      %v416 = vpack.c.bf16 %v389, %v388
      %v417 = vpack.c.bf16 %v391, %v390
      %v418 = vpack.c.bf16 %v393, %v392
      %v419 = vpack.c.bf16 %v395, %v394
      %v420 = vpack.c.bf16 %v397, %v396
      %v421 = vpack.c.bf16 %v399, %v398
      %v422 = vpack.c.bf16 %v401, %v400
      %v423 = vpack.c.bf16 %v403, %v402
      %v424 = vpack.c.bf16 %v405, %v404
      %v425 = vpack.c.bf16 %v407, %v406
      %v426 = vpack.c.bf16 %v409, %v408
      %v427 = vpack.c.bf16 %v411, %v410
      %v444 = vunpack.c.l.b16 %v412
      %v445 = vunpack.c.h.b16 %v412
      %v446 = vunpack.c.l.b16 %v413
      %v447 = vunpack.c.h.b16 %v413
      %v448 = vunpack.c.l.b16 %v414
      %v449 = vunpack.c.h.b16 %v414
      %v450 = vunpack.c.l.b16 %v415
      %v451 = vunpack.c.h.b16 %v415
      %v452 = vunpack.c.l.b16 %v416
      %v453 = vunpack.c.h.b16 %v416
      %v454 = vunpack.c.l.b16 %v417
      %v455 = vunpack.c.h.b16 %v417
      %v456 = vunpack.c.l.b16 %v418
      %v457 = vunpack.c.h.b16 %v418
      %v458 = vunpack.c.l.b16 %v419
      %v459 = vunpack.c.h.b16 %v419
      %v460 = vunpack.c.l.b16 %v420
      %v461 = vunpack.c.h.b16 %v420
      %v462 = vunpack.c.l.b16 %v421
      %v463 = vunpack.c.h.b16 %v421
      %v464 = vunpack.c.l.b16 %v422
      %v465 = vunpack.c.h.b16 %v422
      %v466 = vunpack.c.l.b16 %v423
      %v467 = vunpack.c.h.b16 %v423
      %v468 = vunpack.c.l.b16 %v424
      %v469 = vunpack.c.h.b16 %v424
      %v470 = vunpack.c.l.b16 %v425
      %v471 = vunpack.c.h.b16 %v425
      %v472 = vunpack.c.l.b16 %v426
      %v473 = vunpack.c.h.b16 %v426
      %v474 = vunpack.c.l.b16 %v427
      %v475 = vunpack.c.h.b16 %v427
      %v476 = vpack.c.b16 %v444, %v444
      %v477 = vpack.c.b16 %v445, %v445
      %v478 = vpack.c.b16 %v446, %v446
      %v479 = vpack.c.b16 %v447, %v447
      %v480 = vpack.c.b16 %v448, %v448
      %v481 = vpack.c.b16 %v449, %v449
      %v482 = vpack.c.b16 %v450, %v450
      %v483 = vpack.c.b16 %v451, %v451
      %v484 = vpack.c.b16 %v452, %v452
      %v485 = vpack.c.b16 %v453, %v453
      %v486 = vpack.c.b16 %v454, %v454
      %v487 = vpack.c.b16 %v455, %v455
      %v488 = vpack.c.b16 %v456, %v456
      %v489 = vpack.c.b16 %v457, %v457
      %v490 = vpack.c.b16 %v458, %v458
      %v491 = vpack.c.b16 %v459, %v459
      %v492 = vpack.c.b16 %v460, %v460
      %v493 = vpack.c.b16 %v461, %v461
      %v494 = vpack.c.b16 %v462, %v462
      %v495 = vpack.c.b16 %v463, %v463
      %v496 = vpack.c.b16 %v464, %v464
      %v497 = vpack.c.b16 %v465, %v465
      %v498 = vpack.c.b16 %v466, %v466
      %v499 = vpack.c.b16 %v467, %v467
      %v500 = vpack.c.b16 %v468, %v468
      %v501 = vpack.c.b16 %v469, %v469
      %v502 = vpack.c.b16 %v470, %v470
      %v503 = vpack.c.b16 %v471, %v471
      %v504 = vpack.c.b16 %v472, %v472
      %v505 = vpack.c.b16 %v473, %v473
      %v506 = vpack.c.b16 %v474, %v474
      %v507 = vpack.c.b16 %v475, %v475
      %540 = vst [vmem:[%s172] sm:$0xf] %v476
      %541 = vst [vmem:[%s172 + $0x4] sm:$0xf] %v477
      %542 = vst [vmem:[%s172 + $0x8] sm:$0xf] %v478
      %543 = vst [vmem:[%s172 + $0xc] sm:$0xf] %v479
      %544 = vst [vmem:[%s172 + $0x10] sm:$0xf] %v480
      %545 = vst [vmem:[%s172 + $0x14] sm:$0xf] %v481
      %546 = vst [vmem:[%s172 + $0x18] sm:$0xf] %v482
      %547 = vst [vmem:[%s172 + $0x1c] sm:$0xf] %v483
      %548 = vst [vmem:[%s172 + $0x20] sm:$0xf] %v484
      %549 = vst [vmem:[%s172 + $0x24] sm:$0xf] %v485
      %550 = vst [vmem:[%s172 + $0x28] sm:$0xf] %v486
      %551 = vst [vmem:[%s172 + $0x2c] sm:$0xf] %v487
      %552 = vst [vmem:[%s172 + $0x30] sm:$0xf] %v488
      %553 = vst [vmem:[%s172 + $0x34] sm:$0xf] %v489
      %554 = vst [vmem:[%s172 + $0x38] sm:$0xf] %v490
      %555 = vst [vmem:[%s172 + $0x3c] sm:$0xf] %v491
      %556 = vst [vmem:[%s172 + $0x40] sm:$0xf] %v492
      %557 = vst [vmem:[%s172 + $0x44] sm:$0xf] %v493
      %558 = vst [vmem:[%s172 + $0x48] sm:$0xf] %v494
      %559 = vst [vmem:[%s172 + $0x4c] sm:$0xf] %v495
      %560 = vst [vmem:[%s172 + $0x50] sm:$0xf] %v496
      %561 = vst [vmem:[%s172 + $0x54] sm:$0xf] %v497
      %562 = vst [vmem:[%s172 + $0x58] sm:$0xf] %v498
      %563 = vst [vmem:[%s172 + $0x5c] sm:$0xf] %v499
      %564 = vst [vmem:[%s172 + $0x60] sm:$0xf] %v500
      %565 = vst [vmem:[%s172 + $0x64] sm:$0xf] %v501
      %566 = vst [vmem:[%s172 + $0x68] sm:$0xf] %v502
      %567 = vst [vmem:[%s172 + $0x6c] sm:$0xf] %v503
      %568 = vst [vmem:[%s172 + $0x70] sm:$0xf] %v504
      %569 = vst [vmem:[%s172 + $0x74] sm:$0xf] %v505
      %570 = vst [vmem:[%s172 + $0x78] sm:$0xf] %v506
      %571 = vst [vmem:[%s172 + $0x7c] sm:$0xf] %v507
      %s572 = smul.u32 32, %s14
      %p573 = scmp.lt.s32.totalorder %s572, 63
      %s574 = scalar_select %p573, %s572, 63
      %s575 = smul.addr %s574, 4
      %s576 = scalar_lea.vmem %s3, %s575
      // Predicated region
      $region33: #{vgg_block_forward.7} parent=31 // pred_check
        %p577 = pneg %p100
      $region34: #{vgg_block_forward.7} parent=31 // pred_check_branch
        %579 = sbr.rel (%p577) target = $region36
      $region35: #{vgg_block_forward.7} parent=31 // pred_region
        %s580 = smul.u32 32, %s14
      $region36: #{vgg_block_forward.7} parent=31 // pred_fallthru
        _
    $region32: #{vgg_block_forward.7} parent=5 // pred_fallthru
      _
    %p581 = scmp.le.s32.totalorder 2, %s9
    // Predicated region
    $region37: #{vgg_block_forward.7} parent=5 // pred_check
      %p582 = pneg %p581
    $region38: #{vgg_block_forward.7} parent=5 // pred_check_branch
      %584 = sbr.rel (%p582) target = $region40
    $region39: #{vgg_block_forward.7} parent=5 // pred_region
      %s585 = ssub.s32 %s9, 2
      // Predicated region
      $region41: #{vgg_block_forward.7} parent=39 // pred_check
        %p586 = pneg %p106
      $region42: #{vgg_block_forward.7} parent=39 // pred_check_branch
        %588 = sbr.rel (%p586) target = $region44
      $region43: #{vgg_block_forward.7} parent=39 // pred_region
        %s589 = smul.u32 32, %s15
        %p590 = scmp.lt.s32.totalorder %s589, 63
        %s591 = scalar_select %p590, %s589, 63
        %s592 = smul.addr %s591, 4
        %s593 = scalar_lea.vmem %s3, %s592
      $region44: #{vgg_block_forward.7} parent=39 // pred_fallthru
        _
    $region40: #{vgg_block_forward.7} parent=5 // pred_fallthru
      _
  $region6: #{vgg_block_forward.7} parent=0 // loop_footer
    %s13 = sadd.s32 1, %s9
  $region7: #{vgg_block_forward.7} parent=0 // loop_footer_branch
    %8 = sbr.rel target = $region3
  $region8: #{vgg_block_forward.7} parent=0 // loop_exit
    _

// kernel: vgg_block_forward.6
$region0: #{vgg_block_forward.6}
  #allocation0 [shape = 'u32[]', space=smem, size = 0x4, offset = 0x4, fixed_abs, tag = 'smem constant byte address 0x4 - core index']
  #allocation1 [shape = 'u32[144,128]{1,0:T(1,128)}', space=vmem, size = 0x12000, scoped, tag = 'internal scratch']
  %s0 = inlined_call_operand.vmem [shape: bf16[512,128], index: 0, kind: input, shape index: {}]
  %s1 = inlined_call_operand.vmem [shape: bf16[128,128], index: 1, kind: input, shape index: {}]
  %s2 = inlined_call_operand.vmem [shape: bf16[512,128], index: 2, kind: output, shape index: {0}]
  %s3 = inlined_call_operand.vmem [shape: f32[2,2,128], index: 3, kind: output, shape index: {1}]
  %4 = xla_tuple %s2, %s3
  %s5 = sld [smem:[#allocation0]]
  $region49: #{vgg_block_forward.6} parent=0
    _
  %s7 = ssub.s32 1, %s5
  %s8 = scalar_select 0, %s7, %s5
  loop: start=0, step=1, limit=4
  $region2: #{vgg_block_forward.6} parent=0 // loop_pre_header
    _
  $region3: #{vgg_block_forward.6} parent=0 // loop_header
    %s10 = sphi 0, %s14
    %p11 = scmp.ge.s32.totalorder %s10, 4
    %s20 = sphi 0, %s22
    %s23 = sphi 0, %s20
    %s24 = sphi 0, %s23
    %s40 = sphi 0, %s24
    %s44 = sphi 0, %s44
    %s46 = sphi 0, %s44
    %s47 = sphi 0, %s46
    %s61 = sphi 0, %s47
    %s67 = sphi 0, %s69
    %s70 = sphi 0, %s67
    %s71 = sphi 0, %s70
    %s87 = sphi 0, %s71
    %s93 = sphi 0, %s95
    %s96 = sphi 0, %s93
    %s97 = sphi 0, %s96
    %s113 = sphi 0, %s97
  $region4: #{vgg_block_forward.6} parent=0 // loop_header_branch
    %13 = sbr.rel (%p11) target = $region8
  $region5: #{vgg_block_forward.6} parent=0 // loop_body
    %s15 = ssub.s32 %s10, 1
    %s16 = ssub.s32 %s10, 2
    %s17 = sadd.s32 %s10, 1
    %s18 = ssub.s32 %s10, %s17
    %p19 = scmp.eq.s32.totalorder %s18, 0
    %s21 = sadd.s32 %s20, 1
    %s22 = scalar_select %p19, %s20, %s21
    %p25 = pneg %p19
    %p26 = scmp.eq.s32.totalorder %s10, 1
    %p27 = por %p25, %p26
    %p28 = scmp.ne.s32.totalorder %s20, %s23
    %p29 = scmp.eq.s32.totalorder %s10, 0
    %p30 = por %p28, %p29
    %p31 = scmp.ne.s32.totalorder %s20, %s23
    %p32 = scmp.eq.s32.totalorder %s15, 1
    %p33 = por %p31, %p32
    %p34 = scmp.ne.s32.totalorder %s23, %s24
    %p35 = scmp.eq.s32.totalorder %s15, 0
    %p36 = por %p34, %p35
    %p37 = scmp.ne.s32.totalorder %s23, %s24
    %p38 = scmp.eq.s32.totalorder %s16, 1
    %p39 = por %p37, %p38
    %p41 = scmp.ne.s32.totalorder %s24, %s40
    %p42 = scmp.eq.s32.totalorder %s16, 0
    %p43 = por %p41, %p42
    %s45 = sadd.s32 %s44, 1
    %p48 = scmp.eq.s32.totalorder %s10, 1
    %p49 = scmp.ne.s32.totalorder %s44, %s46
    %p50 = scmp.eq.s32.totalorder %s10, 0
    %p51 = por %p49, %p50
    %p52 = scmp.ne.s32.totalorder %s44, %s46
    %p53 = scmp.eq.s32.totalorder %s15, 1
    %p54 = por %p52, %p53
    %p55 = scmp.ne.s32.totalorder %s46, %s47
    %p56 = scmp.eq.s32.totalorder %s15, 0
    %p57 = por %p55, %p56
    %p58 = scmp.ne.s32.totalorder %s46, %s47
    %p59 = scmp.eq.s32.totalorder %s16, 1
    %p60 = por %p58, %p59
    %p62 = scmp.ne.s32.totalorder %s47, %s61
    %p63 = scmp.eq.s32.totalorder %s16, 0
    %p64 = por %p62, %p63
    %s65 = ssub.s32 %s10, %s17
    %p66 = scmp.eq.s32.totalorder %s65, 0
    %s68 = sadd.s32 %s67, 1
    %s69 = scalar_select %p66, %s67, %s68
    %p72 = pneg %p66
    %p73 = scmp.eq.s32.totalorder %s10, 1
    %p74 = por %p72, %p73
    %p75 = scmp.ne.s32.totalorder %s67, %s70
    %p76 = scmp.eq.s32.totalorder %s10, 0
    %p77 = por %p75, %p76
    %p78 = scmp.ne.s32.totalorder %s67, %s70
    %p79 = scmp.eq.s32.totalorder %s15, 1
    %p80 = por %p78, %p79
    %p81 = scmp.ne.s32.totalorder %s70, %s71
    %p82 = scmp.eq.s32.totalorder %s15, 0
    %p83 = por %p81, %p82
    %p84 = scmp.ne.s32.totalorder %s70, %s71
    %p85 = scmp.eq.s32.totalorder %s16, 1
    %p86 = por %p84, %p85
    %p88 = scmp.ne.s32.totalorder %s71, %s87
    %p89 = scmp.eq.s32.totalorder %s16, 0
    %p90 = por %p88, %p89
    %s91 = ssub.s32 %s10, %s17
    %p92 = scmp.eq.s32.totalorder %s91, 0
    %s94 = sadd.s32 %s93, 1
    %s95 = scalar_select %p92, %s93, %s94
    %p98 = pneg %p92
    %p99 = scmp.eq.s32.totalorder %s10, 1
    %p100 = por %p98, %p99
    %p101 = scmp.ne.s32.totalorder %s93, %s96
    %p102 = scmp.eq.s32.totalorder %s10, 0
    %p103 = por %p101, %p102
    %p104 = scmp.ne.s32.totalorder %s93, %s96
    %p105 = scmp.eq.s32.totalorder %s15, 1
    %p106 = por %p104, %p105
    %p107 = scmp.ne.s32.totalorder %s96, %s97
    %p108 = scmp.eq.s32.totalorder %s15, 0
    %p109 = por %p107, %p108
    %p110 = scmp.ne.s32.totalorder %s96, %s97
    %p111 = scmp.eq.s32.totalorder %s16, 1
    %p112 = por %p110, %p111
    %p114 = scmp.ne.s32.totalorder %s97, %s113
    %p115 = scmp.eq.s32.totalorder %s16, 0
    %p116 = por %p114, %p115
    %p117 = scmp.le.s32.totalorder 1, %s10
    %p118 = scmp.lt.s32.totalorder %s10, 3
    %p119 = pnand %p117, %p118
    %p120 = pneg %p119
    // Predicated region
    $region9: #{vgg_block_forward.6} parent=5 // pred_check
      _
    $region10: #{vgg_block_forward.6} parent=5 // pred_check_branch
      %122 = sbr.rel (%p119) target = $region12
    $region11: #{vgg_block_forward.6} parent=5 // pred_region
      %s123 = ssub.s32 %s10, 1
      // Predicated region
      $region13: #{vgg_block_forward.6} parent=11 // pred_check
        %p124 = pneg %p57
      $region14: #{vgg_block_forward.6} parent=11 // pred_check_branch
        %126 = sbr.rel (%p124) target = $region16
      $region15: #{vgg_block_forward.6} parent=11 // pred_region
        _
      $region16: #{vgg_block_forward.6} parent=11 // pred_fallthru
        _
    $region12: #{vgg_block_forward.6} parent=5 // pred_fallthru
      _
    %p127 = scmp.lt.s32.totalorder %s10, 2
    // Predicated region
    $region17: #{vgg_block_forward.6} parent=5 // pred_check
      %p128 = pneg %p127
    $region18: #{vgg_block_forward.6} parent=5 // pred_check_branch
      %130 = sbr.rel (%p128) target = $region20
    $region19: #{vgg_block_forward.6} parent=5 // pred_region
      // Predicated region
      $region21: #{vgg_block_forward.6} parent=19 // pred_check
        %p131 = pneg %p30
      $region22: #{vgg_block_forward.6} parent=19 // pred_check_branch
        %133 = sbr.rel (%p131) target = $region24
      $region23: #{vgg_block_forward.6} parent=19 // pred_region
        %s134 = smul.u32 32, %s10
        %p135 = scmp.lt.s32.totalorder %s134, 63
        %s136 = scalar_select %p135, %s134, 63
        %s137 = smul.addr %s136, 4
        %s138 = scalar_lea.vmem %s0, %s137
        %s139 = smul.u32 32, %s10
      $region24: #{vgg_block_forward.6} parent=19 // pred_fallthru
        _
    $region20: #{vgg_block_forward.6} parent=5 // pred_fallthru
      _
    %p140 = scmp.le.s32.totalorder 1, %s10
    %p141 = scmp.lt.s32.totalorder %s10, 3
    %p142 = pnand %p140, %p141
    %p143 = pneg %p142
    // Predicated region
    $region25: #{vgg_block_forward.6} parent=5 // pred_check
      _
    $region26: #{vgg_block_forward.6} parent=5 // pred_check_branch
      %145 = sbr.rel (%p142) target = $region28
    $region27: #{vgg_block_forward.6} parent=5 // pred_region
      %s146 = ssub.s32 %s10, 1
      %s147 = smul.u32 32, %s15
      %p148 = scmp.lt.s32.totalorder %s147, 63
      %s149 = scalar_select %p148, %s147, 63
      %s150 = smul.addr %s149, 4
      %s151 = scalar_lea.vmem %s0, %s150
      %p152 = pneg %p36
      %p153 = pneg %p33
      %p154 = pneg %p57
      %p155 = pneg %p54
      %p156 = pneg %p83
      %p157 = pneg %p80
      %s158 = smul.u32 32, %s15
      %p159 = scmp.lt.s32.totalorder %s158, 63
      %s160 = scalar_select %p159, %s158, 63
      %s161 = smul.addr %s160, 4
      %s162 = scalar_lea.vmem %s2, %s161
      %p163 = pneg %p109
      %p164 = pneg %p106
      %p165 = scmp.lt.s32.totalorder %s15, 1
      %s166 = scalar_select %p165, %s15, 1
      %s167 = smul.addr %s166, 2
      %s168 = scalar_lea.vmem %s3, %s167
      %s169 = smul.u32 32, %s15
      %p170 = scmp.lt.s32.totalorder %s169, 63
      %s171 = scalar_select %p170, %s169, 63
      %s172 = smul.addr %s171, 4
      %s173 = scalar_lea.vmem %s0, %s172
      %s174 = smul.u32 32, %s15
      %s175 = smul.u32 32, %s15
      %p176 = scmp.lt.s32.totalorder %s175, 63
      %s177 = scalar_select %p176, %s175, 63
      %s178 = smul.addr %s177, 4
      %s179 = scalar_lea.vmem %s2, %s178
      %s180 = smul.u32 32, %s15
      %p181 = scmp.lt.s32.totalorder %s15, 1
      %s182 = scalar_select %p181, %s15, 1
      %s183 = smul.addr %s182, 2
      %s184 = scalar_lea.vmem %s3, %s183
      %v186 = vld [vmem:[%s173] sm:$0xf]
      %v187 = vld [vmem:[%s173 + $0x4] sm:$0xf]
      %v188 = vld [vmem:[%s173 + $0x8] sm:$0xf]
      %v189 = vld [vmem:[%s173 + $0xc] sm:$0xf]
      %v190 = vld [vmem:[%s173 + $0x10] sm:$0xf]
      %v191 = vld [vmem:[%s173 + $0x14] sm:$0xf]
      %v192 = vld [vmem:[%s173 + $0x18] sm:$0xf]
      %v193 = vld [vmem:[%s173 + $0x1c] sm:$0xf]
      %v194 = vld [vmem:[%s173 + $0x20] sm:$0xf]
      %v195 = vld [vmem:[%s173 + $0x24] sm:$0xf]
      %v196 = vld [vmem:[%s173 + $0x28] sm:$0xf]
      %v197 = vld [vmem:[%s173 + $0x2c] sm:$0xf]
      %v198 = vld [vmem:[%s173 + $0x30] sm:$0xf]
      %v199 = vld [vmem:[%s173 + $0x34] sm:$0xf]
      %v200 = vld [vmem:[%s173 + $0x38] sm:$0xf]
      %v201 = vld [vmem:[%s173 + $0x3c] sm:$0xf]
      %v202 = vld [vmem:[%s173 + $0x40] sm:$0xf]
      %v203 = vld [vmem:[%s173 + $0x44] sm:$0xf]
      %v204 = vld [vmem:[%s173 + $0x48] sm:$0xf]
      %v205 = vld [vmem:[%s173 + $0x4c] sm:$0xf]
      %v206 = vld [vmem:[%s173 + $0x50] sm:$0xf]
      %v207 = vld [vmem:[%s173 + $0x54] sm:$0xf]
      %v208 = vld [vmem:[%s173 + $0x58] sm:$0xf]
      %v209 = vld [vmem:[%s173 + $0x5c] sm:$0xf]
      %v210 = vld [vmem:[%s173 + $0x60] sm:$0xf]
      %v211 = vld [vmem:[%s173 + $0x64] sm:$0xf]
      %v212 = vld [vmem:[%s173 + $0x68] sm:$0xf]
      %v213 = vld [vmem:[%s173 + $0x6c] sm:$0xf]
      %v214 = vld [vmem:[%s173 + $0x70] sm:$0xf]
      %v215 = vld [vmem:[%s173 + $0x74] sm:$0xf]
      %v216 = vld [vmem:[%s173 + $0x78] sm:$0xf]
      %v217 = vld [vmem:[%s173 + $0x7c] sm:$0xf]
      %v218 = vld [vmem:[%s1] sm:$0xf]
      %v219 = vld [vmem:[%s1 + $0x4] sm:$0xf]
      %v220 = vld [vmem:[%s1 + $0x8] sm:$0xf]
      %v221 = vld [vmem:[%s1 + $0xc] sm:$0xf]
      %v222 = vld [vmem:[%s1 + $0x10] sm:$0xf]
      %v223 = vld [vmem:[%s1 + $0x14] sm:$0xf]
      %v224 = vld [vmem:[%s1 + $0x18] sm:$0xf]
      %v225 = vld [vmem:[%s1 + $0x1c] sm:$0xf]
      %v226 = vld [vmem:[%s1 + $0x20] sm:$0xf]
      %v227 = vld [vmem:[%s1 + $0x24] sm:$0xf]
      %v228 = vld [vmem:[%s1 + $0x28] sm:$0xf]
      %v229 = vld [vmem:[%s1 + $0x2c] sm:$0xf]
      %v230 = vld [vmem:[%s1 + $0x30] sm:$0xf]
      %v231 = vld [vmem:[%s1 + $0x34] sm:$0xf]
      %v232 = vld [vmem:[%s1 + $0x38] sm:$0xf]
      %v233 = vld [vmem:[%s1 + $0x3c] sm:$0xf]
      %v266 = vunpack.c.l.b16 %v186
      %v267 = vunpack.c.l.b16 %v187
      %v268 = vunpack.c.l.b16 %v188
      %v269 = vunpack.c.l.b16 %v189
      %v270 = vunpack.c.l.b16 %v190
      %v271 = vunpack.c.l.b16 %v191
      %v272 = vunpack.c.l.b16 %v192
      %v273 = vunpack.c.l.b16 %v193
      %v274 = vunpack.c.l.b16 %v194
      %v275 = vunpack.c.l.b16 %v195
      %v276 = vunpack.c.l.b16 %v196
      %v277 = vunpack.c.l.b16 %v197
      %v278 = vunpack.c.l.b16 %v198
      %v279 = vunpack.c.l.b16 %v199
      %v280 = vunpack.c.l.b16 %v200
      %v281 = vunpack.c.l.b16 %v201
      %v282 = vunpack.c.l.b16 %v202
      %v283 = vunpack.c.l.b16 %v203
      %v284 = vunpack.c.l.b16 %v204
      %v285 = vunpack.c.l.b16 %v205
      %v286 = vunpack.c.l.b16 %v206
      %v287 = vunpack.c.l.b16 %v207
      %v288 = vunpack.c.l.b16 %v208
      %v289 = vunpack.c.l.b16 %v209
      %v290 = vunpack.c.l.b16 %v210
      %v291 = vunpack.c.l.b16 %v211
      %v292 = vunpack.c.l.b16 %v212
      %v293 = vunpack.c.l.b16 %v213
      %v294 = vunpack.c.l.b16 %v214
      %v295 = vunpack.c.l.b16 %v215
      %v296 = vunpack.c.l.b16 %v216
      %v297 = vunpack.c.l.b16 %v217
      %v298 = vpack.c.b16 %v267, %v266
      %v299 = vpack.c.b16 %v269, %v268
      %v300 = vpack.c.b16 %v271, %v270
      %v301 = vpack.c.b16 %v273, %v272
      %v302 = vpack.c.b16 %v275, %v274
      %v303 = vpack.c.b16 %v277, %v276
      %v304 = vpack.c.b16 %v279, %v278
      %v305 = vpack.c.b16 %v281, %v280
      %v306 = vpack.c.b16 %v283, %v282
      %v307 = vpack.c.b16 %v285, %v284
      %v308 = vpack.c.b16 %v287, %v286
      %v309 = vpack.c.b16 %v289, %v288
      %v310 = vpack.c.b16 %v291, %v290
      %v311 = vpack.c.b16 %v293, %v292
      %v312 = vpack.c.b16 %v295, %v294
      %v313 = vpack.c.b16 %v297, %v296
      %v346 = vunpack.c.l.b16 %v218
      %v347 = vunpack.c.l.b16 %v219
      %v348 = vunpack.c.l.b16 %v220
      %v349 = vunpack.c.l.b16 %v221
      %v350 = vunpack.c.l.b16 %v222
      %v351 = vunpack.c.l.b16 %v223
      %v352 = vunpack.c.l.b16 %v224
      %v353 = vunpack.c.l.b16 %v225
      %v354 = vunpack.c.l.b16 %v226
      %v355 = vunpack.c.l.b16 %v227
      %v356 = vunpack.c.l.b16 %v228
      %v357 = vunpack.c.l.b16 %v229
      %v358 = vunpack.c.l.b16 %v230
      %v359 = vunpack.c.l.b16 %v231
      %v360 = vunpack.c.l.b16 %v232
      %v361 = vunpack.c.l.b16 %v233
      %v362 = vpack.c.b16 %v347, %v346
      %v363 = vpack.c.b16 %v349, %v348
      %v364 = vpack.c.b16 %v351, %v350
      %v365 = vpack.c.b16 %v353, %v352
      %v366 = vpack.c.b16 %v355, %v354
      %v367 = vpack.c.b16 %v357, %v356
      %v368 = vpack.c.b16 %v359, %v358
      %v369 = vpack.c.b16 %v361, %v360
      %378 = vmatprep.subr.bf16.mxu0 0
      %379 = vmatpush1.bf16.msra.mxu0 %v369
      %380 = vmatprep.subr.bf16.mxu0 0
      %381 = vmatpush1.bf16.msra.mxu0 %v368
      %382 = vmatprep.subr.bf16.mxu0 0
      %383 = vmatpush1.bf16.msra.mxu0 %v367
      %384 = vmatprep.subr.bf16.mxu0 0
      %385 = vmatpush1.bf16.msra.mxu0 %v366
      %386 = vmatprep.subr.bf16.mxu0 0
      %387 = vmatpush1.bf16.msra.mxu0 %v365
      %388 = vmatprep.subr.bf16.mxu0 0
      %389 = vmatpush1.bf16.msra.mxu0 %v364
      %390 = vmatprep.subr.bf16.mxu0 0
      %391 = vmatpush1.bf16.msra.mxu0 %v363
      %392 = vmatprep.subr.bf16.mxu0 0
      %393 = vmatpush1.bf16.msra.mxu0 %v362
      %394 = vmatprep.subr.bf16.mxu0 0
      %395 = vmatpush2.bf16.msra.mxu0 0
      %396 = vmatprep.subr.bf16.mxu0 0
      %397 = vmatpush2.bf16.msra.mxu0 0
      %398 = vmatprep.subr.bf16.mxu0 0
      %399 = vmatpush2.bf16.msra.mxu0 0
      %400 = vmatprep.subr.bf16.mxu0 0
      %401 = vmatpush2.bf16.msra.mxu0 0
      %402 = vmatprep.subr.bf16.mxu0 0
      %403 = vmatpush2.bf16.msra.mxu0 0
      %404 = vmatprep.subr.bf16.mxu0 0
      %405 = vmatpush2.bf16.msra.mxu0 0
      %406 = vmatprep.subr.bf16.mxu0 0
      %407 = vmatpush2.bf16.msra.mxu0 0
      %408 = vmatprep.subr.bf16.mxu0 0
      %409 = vmatpush2.bf16.msra.mxu0 0
      %410 = vmatprep.mubr.bf16.mxu0 0
      %411 = vmatmul.mubr.bf16.gmra.mxu0 %v298
      %v412 = vpop.f32.mrf.mxu0
      %v413 = vadd.f32 0.0, %v412
      %v414 = vpop.f32.mrf.mxu0
      %v415 = vpop.f32.mrf.mxu0
      %v416 = vadd.f32 0.0, %v415
      %v417 = vpop.f32.mrf.mxu0
      %418 = vmatprep.mubr.bf16.mxu0 0
      %419 = vmatmul.mubr.bf16.gmra.mxu0 %v299
      %v420 = vpop.f32.mrf.mxu0
      %v421 = vadd.f32 0.0, %v420
      %v422 = vpop.f32.mrf.mxu0
      %v423 = vpop.f32.mrf.mxu0
      %v424 = vadd.f32 0.0, %v423
      %v425 = vpop.f32.mrf.mxu0
      %426 = vmatprep.mubr.bf16.mxu0 0
      %427 = vmatmul.mubr.bf16.gmra.mxu0 %v300
      %v428 = vpop.f32.mrf.mxu0
      %v429 = vadd.f32 0.0, %v428
      %v430 = vpop.f32.mrf.mxu0
      %v431 = vpop.f32.mrf.mxu0
      %v432 = vadd.f32 0.0, %v431
      %v433 = vpop.f32.mrf.mxu0
      %434 = vmatprep.mubr.bf16.mxu0 0
      %435 = vmatmul.mubr.bf16.gmra.mxu0 %v301
      %v436 = vpop.f32.mrf.mxu0
      %v437 = vadd.f32 0.0, %v436
      %v438 = vpop.f32.mrf.mxu0
      %v439 = vpop.f32.mrf.mxu0
      %v440 = vadd.f32 0.0, %v439
      %v441 = vpop.f32.mrf.mxu0
      %442 = vmatprep.mubr.bf16.mxu0 0
      %443 = vmatmul.mubr.bf16.gmra.mxu0 %v302
      %v444 = vpop.f32.mrf.mxu0
      %v445 = vadd.f32 0.0, %v444
      %v446 = vpop.f32.mrf.mxu0
      %v447 = vpop.f32.mrf.mxu0
      %v448 = vadd.f32 0.0, %v447
      %v449 = vpop.f32.mrf.mxu0
      %450 = vmatprep.mubr.bf16.mxu0 0
      %451 = vmatmul.mubr.bf16.gmra.mxu0 %v303
      %v452 = vpop.f32.mrf.mxu0
      %v453 = vadd.f32 0.0, %v452
      %v454 = vpop.f32.mrf.mxu0
      %v455 = vpop.f32.mrf.mxu0
      %v456 = vadd.f32 0.0, %v455
      %v457 = vpop.f32.mrf.mxu0
      %458 = vmatprep.mubr.bf16.mxu0 0
      %459 = vmatmul.mubr.bf16.gmra.mxu0 %v304
      %v460 = vpop.f32.mrf.mxu0
      %v461 = vadd.f32 0.0, %v460
      %v462 = vpop.f32.mrf.mxu0
      %v463 = vpop.f32.mrf.mxu0
      %v464 = vadd.f32 0.0, %v463
      %v465 = vpop.f32.mrf.mxu0
      %466 = vmatprep.mubr.bf16.mxu0 0
      %467 = vmatmul.mubr.bf16.gmra.mxu0 %v305
      %v468 = vpop.f32.mrf.mxu0
      %v469 = vadd.f32 0.0, %v468
      %v470 = vpop.f32.mrf.mxu0
      %v471 = vpop.f32.mrf.mxu0
      %v472 = vadd.f32 0.0, %v471
      %v473 = vpop.f32.mrf.mxu0
      %474 = vmatprep.mubr.bf16.mxu0 0
      %475 = vmatmul.mubr.bf16.gmra.mxu0 %v306
      %v476 = vpop.f32.mrf.mxu0
      %v477 = vadd.f32 0.0, %v476
      %v478 = vpop.f32.mrf.mxu0
      %v479 = vpop.f32.mrf.mxu0
      %v480 = vadd.f32 0.0, %v479
      %v481 = vpop.f32.mrf.mxu0
      %482 = vmatprep.mubr.bf16.mxu0 0
      %483 = vmatmul.mubr.bf16.gmra.mxu0 %v307
      %v484 = vpop.f32.mrf.mxu0
      %v485 = vadd.f32 0.0, %v484
      %v486 = vpop.f32.mrf.mxu0
      %v487 = vpop.f32.mrf.mxu0
      %v488 = vadd.f32 0.0, %v487
      %v489 = vpop.f32.mrf.mxu0
      %490 = vmatprep.mubr.bf16.mxu0 0
      %491 = vmatmul.mubr.bf16.gmra.mxu0 %v308
      %v492 = vpop.f32.mrf.mxu0
      %v493 = vadd.f32 0.0, %v492
      %v494 = vpop.f32.mrf.mxu0
      %v495 = vpop.f32.mrf.mxu0
      %v496 = vadd.f32 0.0, %v495
      %v497 = vpop.f32.mrf.mxu0
      %498 = vmatprep.mubr.bf16.mxu0 0
      %499 = vmatmul.mubr.bf16.gmra.mxu0 %v309
      %v500 = vpop.f32.mrf.mxu0
      %v501 = vadd.f32 0.0, %v500
      %v502 = vpop.f32.mrf.mxu0
      %v503 = vpop.f32.mrf.mxu0
      %v504 = vadd.f32 0.0, %v503
      %v505 = vpop.f32.mrf.mxu0
      %506 = vmatprep.mubr.bf16.mxu0 0
      %507 = vmatmul.mubr.bf16.gmra.mxu0 %v310
      %v508 = vpop.f32.mrf.mxu0
      %v509 = vadd.f32 0.0, %v508
      %v510 = vpop.f32.mrf.mxu0
      %v511 = vpop.f32.mrf.mxu0
      %v512 = vadd.f32 0.0, %v511
      %v513 = vpop.f32.mrf.mxu0
      %514 = vmatprep.mubr.bf16.mxu0 0
      %515 = vmatmul.mubr.bf16.gmra.mxu0 %v311
      %v516 = vpop.f32.mrf.mxu0
      %v517 = vadd.f32 0.0, %v516
      %v518 = vpop.f32.mrf.mxu0
      %v519 = vpop.f32.mrf.mxu0
      %v520 = vadd.f32 0.0, %v519
      %v521 = vpop.f32.mrf.mxu0
      %522 = vmatprep.mubr.bf16.mxu0 0
      %523 = vmatmul.mubr.bf16.gmra.mxu0 %v312
      %v524 = vpop.f32.mrf.mxu0
      %v525 = vadd.f32 0.0, %v524
      %v526 = vpop.f32.mrf.mxu0
      %v527 = vpop.f32.mrf.mxu0
      %v528 = vadd.f32 0.0, %v527
      %v529 = vpop.f32.mrf.mxu0
      %530 = vmatprep.mubr.bf16.mxu0 0
      %531 = vmatmul.mubr.bf16.gmra.mxu0 %v313
      %v532 = vpop.f32.mrf.mxu0
      %v533 = vadd.f32 0.0, %v532
      %v534 = vpop.f32.mrf.mxu0
      %v535 = vpop.f32.mrf.mxu0
      %v536 = vadd.f32 0.0, %v535
      %v537 = vpop.f32.mrf.mxu0
      %538 = vdwg.mxu0
      %v539 = vpack.c.bf16 %v416, %v413
      %v540 = vpack.c.bf16 %v424, %v421
      %v541 = vpack.c.bf16 %v432, %v429
      %v542 = vpack.c.bf16 %v440, %v437
      %v543 = vpack.c.bf16 %v448, %v445
      %v544 = vpack.c.bf16 %v456, %v453
      %v545 = vpack.c.bf16 %v464, %v461
      %v546 = vpack.c.bf16 %v472, %v469
      %v547 = vpack.c.bf16 %v480, %v477
      %v548 = vpack.c.bf16 %v488, %v485
      %v549 = vpack.c.bf16 %v496, %v493
      %v550 = vpack.c.bf16 %v504, %v501
      %v551 = vpack.c.bf16 %v512, %v509
      %v552 = vpack.c.bf16 %v520, %v517
      %v553 = vpack.c.bf16 %v528, %v525
      %v554 = vpack.c.bf16 %v536, %v533
      %v571 = vunpack.c.l.b16 %v539
      %v572 = vunpack.c.h.b16 %v539
      %v573 = vunpack.c.l.b16 %v540
      %v574 = vunpack.c.h.b16 %v540
      %v575 = vunpack.c.l.b16 %v541
      %v576 = vunpack.c.h.b16 %v541
      %v577 = vunpack.c.l.b16 %v542
      %v578 = vunpack.c.h.b16 %v542
      %v579 = vunpack.c.l.b16 %v543
      %v580 = vunpack.c.h.b16 %v543
      %v581 = vunpack.c.l.b16 %v544
      %v582 = vunpack.c.h.b16 %v544
      %v583 = vunpack.c.l.b16 %v545
      %v584 = vunpack.c.h.b16 %v545
      %v585 = vunpack.c.l.b16 %v546
      %v586 = vunpack.c.h.b16 %v546
      %v587 = vunpack.c.l.b16 %v547
      %v588 = vunpack.c.h.b16 %v547
      %v589 = vunpack.c.l.b16 %v548
      %v590 = vunpack.c.h.b16 %v548
      %v591 = vunpack.c.l.b16 %v549
      %v592 = vunpack.c.h.b16 %v549
      %v593 = vunpack.c.l.b16 %v550
      %v594 = vunpack.c.h.b16 %v550
      %v595 = vunpack.c.l.b16 %v551
      %v596 = vunpack.c.h.b16 %v551
      %v597 = vunpack.c.l.b16 %v552
      %v598 = vunpack.c.h.b16 %v552
      %v599 = vunpack.c.l.b16 %v553
      %v600 = vunpack.c.h.b16 %v553
      %v601 = vunpack.c.l.b16 %v554
      %v602 = vunpack.c.h.b16 %v554
      %v603 = vpack.c.b16 %v571, %v571
      %v604 = vpack.c.b16 %v572, %v572
      %v605 = vpack.c.b16 %v573, %v573
      %v606 = vpack.c.b16 %v574, %v574
      %v607 = vpack.c.b16 %v575, %v575
      %v608 = vpack.c.b16 %v576, %v576
      %v609 = vpack.c.b16 %v577, %v577
      %v610 = vpack.c.b16 %v578, %v578
      %v611 = vpack.c.b16 %v579, %v579
      %v612 = vpack.c.b16 %v580, %v580
      %v613 = vpack.c.b16 %v581, %v581
      %v614 = vpack.c.b16 %v582, %v582
      %v615 = vpack.c.b16 %v583, %v583
      %v616 = vpack.c.b16 %v584, %v584
      %v617 = vpack.c.b16 %v585, %v585
      %v618 = vpack.c.b16 %v586, %v586
      %v619 = vpack.c.b16 %v587, %v587
      %v620 = vpack.c.b16 %v588, %v588
      %v621 = vpack.c.b16 %v589, %v589
      %v622 = vpack.c.b16 %v590, %v590
      %v623 = vpack.c.b16 %v591, %v591
      %v624 = vpack.c.b16 %v592, %v592
      %v625 = vpack.c.b16 %v593, %v593
      %v626 = vpack.c.b16 %v594, %v594
      %v627 = vpack.c.b16 %v595, %v595
      %v628 = vpack.c.b16 %v596, %v596
      %v629 = vpack.c.b16 %v597, %v597
      %v630 = vpack.c.b16 %v598, %v598
      %v631 = vpack.c.b16 %v599, %v599
      %v632 = vpack.c.b16 %v600, %v600
      %v633 = vpack.c.b16 %v601, %v601
      %v634 = vpack.c.b16 %v602, %v602
      %667 = vst [vmem:[%s179] sm:$0xf] %v603
      %668 = vst [vmem:[%s179 + $0x4] sm:$0xf] %v604
      %669 = vst [vmem:[%s179 + $0x8] sm:$0xf] %v605
      %670 = vst [vmem:[%s179 + $0xc] sm:$0xf] %v606
      %671 = vst [vmem:[%s179 + $0x10] sm:$0xf] %v607
      %672 = vst [vmem:[%s179 + $0x14] sm:$0xf] %v608
      %673 = vst [vmem:[%s179 + $0x18] sm:$0xf] %v609
      %674 = vst [vmem:[%s179 + $0x1c] sm:$0xf] %v610
      %675 = vst [vmem:[%s179 + $0x20] sm:$0xf] %v611
      %676 = vst [vmem:[%s179 + $0x24] sm:$0xf] %v612
      %677 = vst [vmem:[%s179 + $0x28] sm:$0xf] %v613
      %678 = vst [vmem:[%s179 + $0x2c] sm:$0xf] %v614
      %679 = vst [vmem:[%s179 + $0x30] sm:$0xf] %v615
      %680 = vst [vmem:[%s179 + $0x34] sm:$0xf] %v616
      %681 = vst [vmem:[%s179 + $0x38] sm:$0xf] %v617
      %682 = vst [vmem:[%s179 + $0x3c] sm:$0xf] %v618
      %683 = vst [vmem:[%s179 + $0x40] sm:$0xf] %v619
      %684 = vst [vmem:[%s179 + $0x44] sm:$0xf] %v620
      %685 = vst [vmem:[%s179 + $0x48] sm:$0xf] %v621
      %686 = vst [vmem:[%s179 + $0x4c] sm:$0xf] %v622
      %687 = vst [vmem:[%s179 + $0x50] sm:$0xf] %v623
      %688 = vst [vmem:[%s179 + $0x54] sm:$0xf] %v624
      %689 = vst [vmem:[%s179 + $0x58] sm:$0xf] %v625
      %690 = vst [vmem:[%s179 + $0x5c] sm:$0xf] %v626
      %691 = vst [vmem:[%s179 + $0x60] sm:$0xf] %v627
      %692 = vst [vmem:[%s179 + $0x64] sm:$0xf] %v628
      %693 = vst [vmem:[%s179 + $0x68] sm:$0xf] %v629
      %694 = vst [vmem:[%s179 + $0x6c] sm:$0xf] %v630
      %695 = vst [vmem:[%s179 + $0x70] sm:$0xf] %v631
      %696 = vst [vmem:[%s179 + $0x74] sm:$0xf] %v632
      %697 = vst [vmem:[%s179 + $0x78] sm:$0xf] %v633
      %698 = vst [vmem:[%s179 + $0x7c] sm:$0xf] %v634
      %v699 = vadd.f32 %v413, %v416
      %v700 = vadd.f32 %v699, %v421
      %v701 = vadd.f32 %v700, %v424
      %v702 = vadd.f32 %v701, %v429
      %v703 = vadd.f32 %v702, %v432
      %v704 = vadd.f32 %v703, %v437
      %v705 = vadd.f32 %v704, %v440
      %v706 = vadd.f32 %v705, %v445
      %v707 = vadd.f32 %v706, %v448
      %v708 = vadd.f32 %v707, %v453
      %v709 = vadd.f32 %v708, %v456
      %v710 = vadd.f32 %v709, %v461
      %v711 = vadd.f32 %v710, %v464
      %v712 = vadd.f32 %v711, %v469
      %v713 = vadd.f32 %v712, %v472
      %v714 = vadd.f32 %v713, %v477
      %v715 = vadd.f32 %v714, %v480
      %v716 = vadd.f32 %v715, %v485
      %v717 = vadd.f32 %v716, %v488
      %v718 = vadd.f32 %v717, %v493
      %v719 = vadd.f32 %v718, %v496
      %v720 = vadd.f32 %v719, %v501
      %v721 = vadd.f32 %v720, %v504
      %v722 = vadd.f32 %v721, %v509
      %v723 = vadd.f32 %v722, %v512
      %v724 = vadd.f32 %v723, %v517
      %v725 = vadd.f32 %v724, %v520
      %v726 = vadd.f32 %v725, %v525
      %v727 = vadd.f32 %v726, %v528
      %v728 = vadd.f32 %v727, %v533
      %v729 = vadd.f32 %v728, %v536
      %v730 = vrot.slane %v729, 4
      %v731 = vadd.f32 %v729, %v730
      %v732 = vrot.slane %v731, 2
      %v733 = vadd.f32 %v731, %v732
      %v734 = vrot.slane %v733, 1
      %v735 = vadd.f32 %v733, %v734
      %v736 = vmul.f32 %v413, %v413
      %v737 = vmul.f32 %v416, %v416
      %v738 = vmul.f32 %v421, %v421
      %v739 = vmul.f32 %v424, %v424
      %v740 = vmul.f32 %v429, %v429
      %v741 = vmul.f32 %v432, %v432
      %v742 = vmul.f32 %v437, %v437
      %v743 = vmul.f32 %v440, %v440
      %v744 = vmul.f32 %v445, %v445
      %v745 = vmul.f32 %v448, %v448
      %v746 = vmul.f32 %v453, %v453
      %v747 = vmul.f32 %v456, %v456
      %v748 = vmul.f32 %v461, %v461
      %v749 = vmul.f32 %v464, %v464
      %v750 = vmul.f32 %v469, %v469
      %v751 = vmul.f32 %v472, %v472
      %v752 = vmul.f32 %v477, %v477
      %v753 = vmul.f32 %v480, %v480
      %v754 = vmul.f32 %v485, %v485
      %v755 = vmul.f32 %v488, %v488
      %v756 = vmul.f32 %v493, %v493
      %v757 = vmul.f32 %v496, %v496
      %v758 = vmul.f32 %v501, %v501
      %v759 = vmul.f32 %v504, %v504
      %v760 = vmul.f32 %v509, %v509
      %v761 = vmul.f32 %v512, %v512
      %v762 = vmul.f32 %v517, %v517
      %v763 = vmul.f32 %v520, %v520
      %v764 = vmul.f32 %v525, %v525
      %v765 = vmul.f32 %v528, %v528
      %v766 = vmul.f32 %v533, %v533
      %v767 = vmul.f32 %v536, %v536
      %v768 = vadd.f32 %v736, %v737
      %v769 = vadd.f32 %v768, %v738
      %v770 = vadd.f32 %v769, %v739
      %v771 = vadd.f32 %v770, %v740
      %v772 = vadd.f32 %v771, %v741
      %v773 = vadd.f32 %v772, %v742
      %v774 = vadd.f32 %v773, %v743
      %v775 = vadd.f32 %v774, %v744
      %v776 = vadd.f32 %v775, %v745
      %v777 = vadd.f32 %v776, %v746
      %v778 = vadd.f32 %v777, %v747
      %v779 = vadd.f32 %v778, %v748
      %v780 = vadd.f32 %v779, %v749
      %v781 = vadd.f32 %v780, %v750
      %v782 = vadd.f32 %v781, %v751
      %v783 = vadd.f32 %v782, %v752
      %v784 = vadd.f32 %v783, %v753
      %v785 = vadd.f32 %v784, %v754
      %v786 = vadd.f32 %v785, %v755
      %v787 = vadd.f32 %v786, %v756
      %v788 = vadd.f32 %v787, %v757
      %v789 = vadd.f32 %v788, %v758
      %v790 = vadd.f32 %v789, %v759
      %v791 = vadd.f32 %v790, %v760
      %v792 = vadd.f32 %v791, %v761
      %v793 = vadd.f32 %v792, %v762
      %v794 = vadd.f32 %v793, %v763
      %v795 = vadd.f32 %v794, %v764
      %v796 = vadd.f32 %v795, %v765
      %v797 = vadd.f32 %v796, %v766
      %v798 = vadd.f32 %v797, %v767
      %v799 = vrot.slane %v798, 4
      %v800 = vadd.f32 %v798, %v799
      %v801 = vrot.slane %v800, 2
      %v802 = vadd.f32 %v800, %v801
      %v803 = vrot.slane %v802, 1
      %v804 = vadd.f32 %v802, %v803
      %vm805 = vcmask 1040384
      %v806 = vsel %vm805, %v735, %v804
      %807 = vst [vmem:[%s184] sm:$0x3] %v806
      %s808 = smul.u32 32, %s15
      %p809 = scmp.lt.s32.totalorder %s808, 63
      %s810 = scalar_select %p809, %s808, 63
      %s811 = smul.addr %s810, 4
      %s812 = scalar_lea.vmem %s2, %s811
      %p813 = scmp.lt.s32.totalorder %s15, 1
      %s814 = scalar_select %p813, %s15, 1
      %s815 = smul.addr %s814, 2
      %s816 = scalar_lea.vmem %s3, %s815
      // Predicated region
      $region29: #{vgg_block_forward.6} parent=27 // pred_check
        %p817 = pneg %p80
      $region30: #{vgg_block_forward.6} parent=27 // pred_check_branch
        %819 = sbr.rel (%p817) target = $region32
      $region31: #{vgg_block_forward.6} parent=27 // pred_region
        %s820 = smul.u32 32, %s15
      $region32: #{vgg_block_forward.6} parent=27 // pred_fallthru
        _
      // Predicated region
      $region33: #{vgg_block_forward.6} parent=27 // pred_check
        %p821 = pneg %p106
      $region34: #{vgg_block_forward.6} parent=27 // pred_check_branch
        %823 = sbr.rel (%p821) target = $region36
      $region35: #{vgg_block_forward.6} parent=27 // pred_region
        _
      $region36: #{vgg_block_forward.6} parent=27 // pred_fallthru
        _
    $region28: #{vgg_block_forward.6} parent=5 // pred_fallthru
      _
    %p824 = scmp.le.s32.totalorder 2, %s10
    // Predicated region
    $region37: #{vgg_block_forward.6} parent=5 // pred_check
      %p825 = pneg %p824
    $region38: #{vgg_block_forward.6} parent=5 // pred_check_branch
      %827 = sbr.rel (%p825) target = $region40
    $region39: #{vgg_block_forward.6} parent=5 // pred_region
      %s828 = ssub.s32 %s10, 2
      // Predicated region
      $region41: #{vgg_block_forward.6} parent=39 // pred_check
        %p829 = pneg %p86
      $region42: #{vgg_block_forward.6} parent=39 // pred_check_branch
        %831 = sbr.rel (%p829) target = $region44
      $region43: #{vgg_block_forward.6} parent=39 // pred_region
        %s832 = smul.u32 32, %s16
        %p833 = scmp.lt.s32.totalorder %s832, 63
        %s834 = scalar_select %p833, %s832, 63
        %s835 = smul.addr %s834, 4
        %s836 = scalar_lea.vmem %s2, %s835
      $region44: #{vgg_block_forward.6} parent=39 // pred_fallthru
        _
      // Predicated region
      $region45: #{vgg_block_forward.6} parent=39 // pred_check
        %p837 = pneg %p112
      $region46: #{vgg_block_forward.6} parent=39 // pred_check_branch
        %839 = sbr.rel (%p837) target = $region48
      $region47: #{vgg_block_forward.6} parent=39 // pred_region
        %p840 = scmp.lt.s32.totalorder %s16, 1
        %s841 = scalar_select %p840, %s16, 1
        %s842 = smul.addr %s841, 2
        %s843 = scalar_lea.vmem %s3, %s842
      $region48: #{vgg_block_forward.6} parent=39 // pred_fallthru
        _
    $region40: #{vgg_block_forward.6} parent=5 // pred_fallthru
      _
  $region6: #{vgg_block_forward.6} parent=0 // loop_footer
    %s14 = sadd.s32 1, %s10
  $region7: #{vgg_block_forward.6} parent=0 // loop_footer_branch
    %9 = sbr.rel target = $region3
  $region8: #{vgg_block_forward.6} parent=0 // loop_exit
    _

// kernel: vgg_block_forward.11
$region0: #{vgg_block_forward.11}
  #allocation0 [shape = 'u32[]', space=smem, size = 0x4, offset = 0x4, fixed_abs, tag = 'smem constant byte address 0x4 - core index']
  #allocation1 [shape = 'u32[144,128]{1,0:T(1,128)}', space=vmem, size = 0x12000, scoped, tag = 'internal scratch']
  %s0 = inlined_call_operand.vmem [shape: bf16[512,128], index: 0, kind: input, shape index: {}]
  %s1 = inlined_call_operand.vmem [shape: f32[1,128], index: 1, kind: input, shape index: {}]
  %s2 = inlined_call_operand.vmem [shape: f32[1,128], index: 2, kind: input, shape index: {}]
  %s3 = inlined_call_operand.vmem [shape: f32[512,128], index: 3, kind: output, shape index: {}]
  %s4 = sld [smem:[#allocation0]]
  $region45: #{vgg_block_forward.11} parent=0
    _
  %s6 = ssub.s32 1, %s4
  %s7 = scalar_select 0, %s6, %s4
  loop: start=0, step=1, limit=4
  $region2: #{vgg_block_forward.11} parent=0 // loop_pre_header
    _
  $region3: #{vgg_block_forward.11} parent=0 // loop_header
    %s9 = sphi 0, %s13
    %p10 = scmp.ge.s32.totalorder %s9, 4
    %s19 = sphi 0, %s21
    %s22 = sphi 0, %s19
    %s23 = sphi 0, %s22
    %s39 = sphi 0, %s23
    %s43 = sphi 0, %s43
    %s45 = sphi 0, %s43
    %s46 = sphi 0, %s45
    %s60 = sphi 0, %s46
    %s64 = sphi 0, %s64
    %s66 = sphi 0, %s64
    %s67 = sphi 0, %s66
    %s81 = sphi 0, %s67
    %s87 = sphi 0, %s89
    %s90 = sphi 0, %s87
    %s91 = sphi 0, %s90
    %s107 = sphi 0, %s91
  $region4: #{vgg_block_forward.11} parent=0 // loop_header_branch
    %12 = sbr.rel (%p10) target = $region8
  $region5: #{vgg_block_forward.11} parent=0 // loop_body
    %s14 = ssub.s32 %s9, 1
    %s15 = ssub.s32 %s9, 2
    %s16 = sadd.s32 %s9, 1
    %s17 = ssub.s32 %s9, %s16
    %p18 = scmp.eq.s32.totalorder %s17, 0
    %s20 = sadd.s32 %s19, 1
    %s21 = scalar_select %p18, %s19, %s20
    %p24 = pneg %p18
    %p25 = scmp.eq.s32.totalorder %s9, 1
    %p26 = por %p24, %p25
    %p27 = scmp.ne.s32.totalorder %s19, %s22
    %p28 = scmp.eq.s32.totalorder %s9, 0
    %p29 = por %p27, %p28
    %p30 = scmp.ne.s32.totalorder %s19, %s22
    %p31 = scmp.eq.s32.totalorder %s14, 1
    %p32 = por %p30, %p31
    %p33 = scmp.ne.s32.totalorder %s22, %s23
    %p34 = scmp.eq.s32.totalorder %s14, 0
    %p35 = por %p33, %p34
    %p36 = scmp.ne.s32.totalorder %s22, %s23
    %p37 = scmp.eq.s32.totalorder %s15, 1
    %p38 = por %p36, %p37
    %p40 = scmp.ne.s32.totalorder %s23, %s39
    %p41 = scmp.eq.s32.totalorder %s15, 0
    %p42 = por %p40, %p41
    %s44 = sadd.s32 %s43, 1
    %p47 = scmp.eq.s32.totalorder %s9, 1
    %p48 = scmp.ne.s32.totalorder %s43, %s45
    %p49 = scmp.eq.s32.totalorder %s9, 0
    %p50 = por %p48, %p49
    %p51 = scmp.ne.s32.totalorder %s43, %s45
    %p52 = scmp.eq.s32.totalorder %s14, 1
    %p53 = por %p51, %p52
    %p54 = scmp.ne.s32.totalorder %s45, %s46
    %p55 = scmp.eq.s32.totalorder %s14, 0
    %p56 = por %p54, %p55
    %p57 = scmp.ne.s32.totalorder %s45, %s46
    %p58 = scmp.eq.s32.totalorder %s15, 1
    %p59 = por %p57, %p58
    %p61 = scmp.ne.s32.totalorder %s46, %s60
    %p62 = scmp.eq.s32.totalorder %s15, 0
    %p63 = por %p61, %p62
    %s65 = sadd.s32 %s64, 1
    %p68 = scmp.eq.s32.totalorder %s9, 1
    %p69 = scmp.ne.s32.totalorder %s64, %s66
    %p70 = scmp.eq.s32.totalorder %s9, 0
    %p71 = por %p69, %p70
    %p72 = scmp.ne.s32.totalorder %s64, %s66
    %p73 = scmp.eq.s32.totalorder %s14, 1
    %p74 = por %p72, %p73
    %p75 = scmp.ne.s32.totalorder %s66, %s67
    %p76 = scmp.eq.s32.totalorder %s14, 0
    %p77 = por %p75, %p76
    %p78 = scmp.ne.s32.totalorder %s66, %s67
    %p79 = scmp.eq.s32.totalorder %s15, 1
    %p80 = por %p78, %p79
    %p82 = scmp.ne.s32.totalorder %s67, %s81
    %p83 = scmp.eq.s32.totalorder %s15, 0
    %p84 = por %p82, %p83
    %s85 = ssub.s32 %s9, %s16
    %p86 = scmp.eq.s32.totalorder %s85, 0
    %s88 = sadd.s32 %s87, 1
    %s89 = scalar_select %p86, %s87, %s88
    %p92 = pneg %p86
    %p93 = scmp.eq.s32.totalorder %s9, 1
    %p94 = por %p92, %p93
    %p95 = scmp.ne.s32.totalorder %s87, %s90
    %p96 = scmp.eq.s32.totalorder %s9, 0
    %p97 = por %p95, %p96
    %p98 = scmp.ne.s32.totalorder %s87, %s90
    %p99 = scmp.eq.s32.totalorder %s14, 1
    %p100 = por %p98, %p99
    %p101 = scmp.ne.s32.totalorder %s90, %s91
    %p102 = scmp.eq.s32.totalorder %s14, 0
    %p103 = por %p101, %p102
    %p104 = scmp.ne.s32.totalorder %s90, %s91
    %p105 = scmp.eq.s32.totalorder %s15, 1
    %p106 = por %p104, %p105
    %p108 = scmp.ne.s32.totalorder %s91, %s107
    %p109 = scmp.eq.s32.totalorder %s15, 0
    %p110 = por %p108, %p109
    %p111 = scmp.le.s32.totalorder 1, %s9
    %p112 = scmp.lt.s32.totalorder %s9, 3
    %p113 = pnand %p111, %p112
    %p114 = pneg %p113
    // Predicated region
    $region9: #{vgg_block_forward.11} parent=5 // pred_check
      _
    $region10: #{vgg_block_forward.11} parent=5 // pred_check_branch
      %116 = sbr.rel (%p113) target = $region12
    $region11: #{vgg_block_forward.11} parent=5 // pred_region
      %s117 = ssub.s32 %s9, 1
      // Predicated region
      $region13: #{vgg_block_forward.11} parent=11 // pred_check
        %p118 = pneg %p56
      $region14: #{vgg_block_forward.11} parent=11 // pred_check_branch
        %120 = sbr.rel (%p118) target = $region16
      $region15: #{vgg_block_forward.11} parent=11 // pred_region
        _
      $region16: #{vgg_block_forward.11} parent=11 // pred_fallthru
        _
      // Predicated region
      $region17: #{vgg_block_forward.11} parent=11 // pred_check
        %p121 = pneg %p77
      $region18: #{vgg_block_forward.11} parent=11 // pred_check_branch
        %123 = sbr.rel (%p121) target = $region20
      $region19: #{vgg_block_forward.11} parent=11 // pred_region
        _
      $region20: #{vgg_block_forward.11} parent=11 // pred_fallthru
        _
    $region12: #{vgg_block_forward.11} parent=5 // pred_fallthru
      _
    %p124 = scmp.lt.s32.totalorder %s9, 2
    // Predicated region
    $region21: #{vgg_block_forward.11} parent=5 // pred_check
      %p125 = pneg %p124
    $region22: #{vgg_block_forward.11} parent=5 // pred_check_branch
      %127 = sbr.rel (%p125) target = $region24
    $region23: #{vgg_block_forward.11} parent=5 // pred_region
      // Predicated region
      $region25: #{vgg_block_forward.11} parent=23 // pred_check
        %p128 = pneg %p29
      $region26: #{vgg_block_forward.11} parent=23 // pred_check_branch
        %130 = sbr.rel (%p128) target = $region28
      $region27: #{vgg_block_forward.11} parent=23 // pred_region
        %s131 = smul.u32 32, %s9
        %p132 = scmp.lt.s32.totalorder %s131, 63
        %s133 = scalar_select %p132, %s131, 63
        %s134 = smul.addr %s133, 4
        %s135 = scalar_lea.vmem %s0, %s134
        %s136 = smul.u32 32, %s9
      $region28: #{vgg_block_forward.11} parent=23 // pred_fallthru
        _
    $region24: #{vgg_block_forward.11} parent=5 // pred_fallthru
      _
    %p137 = scmp.le.s32.totalorder 1, %s9
    %p138 = scmp.lt.s32.totalorder %s9, 3
    %p139 = pnand %p137, %p138
    %p140 = pneg %p139
    // Predicated region
    $region29: #{vgg_block_forward.11} parent=5 // pred_check
      _
    $region30: #{vgg_block_forward.11} parent=5 // pred_check_branch
      %142 = sbr.rel (%p139) target = $region32
    $region31: #{vgg_block_forward.11} parent=5 // pred_region
      %s143 = ssub.s32 %s9, 1
      %s144 = smul.u32 32, %s14
      %p145 = scmp.lt.s32.totalorder %s144, 63
      %s146 = scalar_select %p145, %s144, 63
      %s147 = smul.addr %s146, 4
      %s148 = scalar_lea.vmem %s0, %s147
      %p149 = pneg %p35
      %p150 = pneg %p32
      %p151 = pneg %p56
      %p152 = pneg %p53
      %p153 = pneg %p77
      %p154 = pneg %p74
      %p155 = pneg %p103
      %p156 = pneg %p100
      %s157 = smul.u32 32, %s14
      %p158 = scmp.lt.s32.totalorder %s157, 63
      %s159 = scalar_select %p158, %s157, 63
      %s160 = smul.addr %s159, 8
      %s161 = scalar_lea.vmem %s3, %s160
      %s162 = smul.u32 32, %s14
      %p163 = scmp.lt.s32.totalorder %s162, 63
      %s164 = scalar_select %p163, %s162, 63
      %s165 = smul.addr %s164, 4
      %s166 = scalar_lea.vmem %s0, %s165
      %s167 = smul.u32 32, %s14
      %s168 = smul.u32 32, %s14
      %p169 = scmp.lt.s32.totalorder %s168, 63
      %s170 = scalar_select %p169, %s168, 63
      %s171 = smul.addr %s170, 8
      %s172 = scalar_lea.vmem %s3, %s171
      %s173 = smul.u32 32, %s14
      %v174 = vld [vmem:[%s166] sm:$0xf]
      %v175 = vld [vmem:[%s166 + $0x4] sm:$0xf]
      %v176 = vld [vmem:[%s166 + $0x8] sm:$0xf]
      %v177 = vld [vmem:[%s166 + $0xc] sm:$0xf]
      %v178 = vld [vmem:[%s166 + $0x10] sm:$0xf]
      %v179 = vld [vmem:[%s166 + $0x14] sm:$0xf]
      %v180 = vld [vmem:[%s166 + $0x18] sm:$0xf]
      %v181 = vld [vmem:[%s166 + $0x1c] sm:$0xf]
      %v182 = vld [vmem:[%s166 + $0x20] sm:$0xf]
      %v183 = vld [vmem:[%s166 + $0x24] sm:$0xf]
      %v184 = vld [vmem:[%s166 + $0x28] sm:$0xf]
      %v185 = vld [vmem:[%s166 + $0x2c] sm:$0xf]
      %v186 = vld [vmem:[%s166 + $0x30] sm:$0xf]
      %v187 = vld [vmem:[%s166 + $0x34] sm:$0xf]
      %v188 = vld [vmem:[%s166 + $0x38] sm:$0xf]
      %v189 = vld [vmem:[%s166 + $0x3c] sm:$0xf]
      %v190 = vld [vmem:[%s166 + $0x40] sm:$0xf]
      %v191 = vld [vmem:[%s166 + $0x44] sm:$0xf]
      %v192 = vld [vmem:[%s166 + $0x48] sm:$0xf]
      %v193 = vld [vmem:[%s166 + $0x4c] sm:$0xf]
      %v194 = vld [vmem:[%s166 + $0x50] sm:$0xf]
      %v195 = vld [vmem:[%s166 + $0x54] sm:$0xf]
      %v196 = vld [vmem:[%s166 + $0x58] sm:$0xf]
      %v197 = vld [vmem:[%s166 + $0x5c] sm:$0xf]
      %v198 = vld [vmem:[%s166 + $0x60] sm:$0xf]
      %v199 = vld [vmem:[%s166 + $0x64] sm:$0xf]
      %v200 = vld [vmem:[%s166 + $0x68] sm:$0xf]
      %v201 = vld [vmem:[%s166 + $0x6c] sm:$0xf]
      %v202 = vld [vmem:[%s166 + $0x70] sm:$0xf]
      %v203 = vld [vmem:[%s166 + $0x74] sm:$0xf]
      %v204 = vld [vmem:[%s166 + $0x78] sm:$0xf]
      %v205 = vld [vmem:[%s166 + $0x7c] sm:$0xf]
      %v206 = vunpack.c.l.bf16 %v174
      %v207 = vunpack.c.l.bf16 %v175
      %v208 = vunpack.c.l.bf16 %v176
      %v209 = vunpack.c.l.bf16 %v177
      %v210 = vunpack.c.l.bf16 %v178
      %v211 = vunpack.c.l.bf16 %v179
      %v212 = vunpack.c.l.bf16 %v180
      %v213 = vunpack.c.l.bf16 %v181
      %v214 = vunpack.c.l.bf16 %v182
      %v215 = vunpack.c.l.bf16 %v183
      %v216 = vunpack.c.l.bf16 %v184
      %v217 = vunpack.c.l.bf16 %v185
      %v218 = vunpack.c.l.bf16 %v186
      %v219 = vunpack.c.l.bf16 %v187
      %v220 = vunpack.c.l.bf16 %v188
      %v221 = vunpack.c.l.bf16 %v189
      %v222 = vunpack.c.l.bf16 %v190
      %v223 = vunpack.c.l.bf16 %v191
      %v224 = vunpack.c.l.bf16 %v192
      %v225 = vunpack.c.l.bf16 %v193
      %v226 = vunpack.c.l.bf16 %v194
      %v227 = vunpack.c.l.bf16 %v195
      %v228 = vunpack.c.l.bf16 %v196
      %v229 = vunpack.c.l.bf16 %v197
      %v230 = vunpack.c.l.bf16 %v198
      %v231 = vunpack.c.l.bf16 %v199
      %v232 = vunpack.c.l.bf16 %v200
      %v233 = vunpack.c.l.bf16 %v201
      %v234 = vunpack.c.l.bf16 %v202
      %v235 = vunpack.c.l.bf16 %v203
      %v236 = vunpack.c.l.bf16 %v204
      %v237 = vunpack.c.l.bf16 %v205
      %v238 = vld [vmem:[%s1] sm:$0x1]
      %v240 = vlaneseq
      %v241 = vshrl.u32 %v240, 7
      %v242 = vsub.s32 0, %v241
      %v243 = vrot.slane %v238, %v242
      %v245 = vmul.f32 %v206, %v243
      %v246 = vmul.f32 %v207, %v243
      %v247 = vmul.f32 %v208, %v243
      %v248 = vmul.f32 %v209, %v243
      %v249 = vmul.f32 %v210, %v243
      %v250 = vmul.f32 %v211, %v243
      %v251 = vmul.f32 %v212, %v243
      %v252 = vmul.f32 %v213, %v243
      %v253 = vmul.f32 %v214, %v243
      %v254 = vmul.f32 %v215, %v243
      %v255 = vmul.f32 %v216, %v243
      %v256 = vmul.f32 %v217, %v243
      %v257 = vmul.f32 %v218, %v243
      %v258 = vmul.f32 %v219, %v243
      %v259 = vmul.f32 %v220, %v243
      %v260 = vmul.f32 %v221, %v243
      %v261 = vmul.f32 %v222, %v243
      %v262 = vmul.f32 %v223, %v243
      %v263 = vmul.f32 %v224, %v243
      %v264 = vmul.f32 %v225, %v243
      %v265 = vmul.f32 %v226, %v243
      %v266 = vmul.f32 %v227, %v243
      %v267 = vmul.f32 %v228, %v243
      %v268 = vmul.f32 %v229, %v243
      %v269 = vmul.f32 %v230, %v243
      %v270 = vmul.f32 %v231, %v243
      %v271 = vmul.f32 %v232, %v243
      %v272 = vmul.f32 %v233, %v243
      %v273 = vmul.f32 %v234, %v243
      %v274 = vmul.f32 %v235, %v243
      %v275 = vmul.f32 %v236, %v243
      %v276 = vmul.f32 %v237, %v243
      %v277 = vld [vmem:[%s2] sm:$0x1]
      %v279 = vlaneseq
      %v280 = vshrl.u32 %v279, 7
      %v281 = vsub.s32 0, %v280
      %v282 = vrot.slane %v277, %v281
      %v284 = vadd.f32 %v245, %v282
      %v285 = vadd.f32 %v246, %v282
      %v286 = vadd.f32 %v247, %v282
      %v287 = vadd.f32 %v248, %v282
      %v288 = vadd.f32 %v249, %v282
      %v289 = vadd.f32 %v250, %v282
      %v290 = vadd.f32 %v251, %v282
      %v291 = vadd.f32 %v252, %v282
      %v292 = vadd.f32 %v253, %v282
      %v293 = vadd.f32 %v254, %v282
      %v294 = vadd.f32 %v255, %v282
      %v295 = vadd.f32 %v256, %v282
      %v296 = vadd.f32 %v257, %v282
      %v297 = vadd.f32 %v258, %v282
      %v298 = vadd.f32 %v259, %v282
      %v299 = vadd.f32 %v260, %v282
      %v300 = vadd.f32 %v261, %v282
      %v301 = vadd.f32 %v262, %v282
      %v302 = vadd.f32 %v263, %v282
      %v303 = vadd.f32 %v264, %v282
      %v304 = vadd.f32 %v265, %v282
      %v305 = vadd.f32 %v266, %v282
      %v306 = vadd.f32 %v267, %v282
      %v307 = vadd.f32 %v268, %v282
      %v308 = vadd.f32 %v269, %v282
      %v309 = vadd.f32 %v270, %v282
      %v310 = vadd.f32 %v271, %v282
      %v311 = vadd.f32 %v272, %v282
      %v312 = vadd.f32 %v273, %v282
      %v313 = vadd.f32 %v274, %v282
      %v314 = vadd.f32 %v275, %v282
      %v315 = vadd.f32 %v276, %v282
      %vm316 = vcmp.ge.f32.partialorder %v284, 0.0
      %vm317 = vcmp.ge.f32.partialorder %v285, 0.0
      %vm318 = vcmp.ge.f32.partialorder %v286, 0.0
      %vm319 = vcmp.ge.f32.partialorder %v287, 0.0
      %vm320 = vcmp.ge.f32.partialorder %v288, 0.0
      %vm321 = vcmp.ge.f32.partialorder %v289, 0.0
      %vm322 = vcmp.ge.f32.partialorder %v290, 0.0
      %vm323 = vcmp.ge.f32.partialorder %v291, 0.0
      %vm324 = vcmp.ge.f32.partialorder %v292, 0.0
      %vm325 = vcmp.ge.f32.partialorder %v293, 0.0
      %vm326 = vcmp.ge.f32.partialorder %v294, 0.0
      %vm327 = vcmp.ge.f32.partialorder %v295, 0.0
      %vm328 = vcmp.ge.f32.partialorder %v296, 0.0
      %vm329 = vcmp.ge.f32.partialorder %v297, 0.0
      %vm330 = vcmp.ge.f32.partialorder %v298, 0.0
      %vm331 = vcmp.ge.f32.partialorder %v299, 0.0
      %vm332 = vcmp.ge.f32.partialorder %v300, 0.0
      %vm333 = vcmp.ge.f32.partialorder %v301, 0.0
      %vm334 = vcmp.ge.f32.partialorder %v302, 0.0
      %vm335 = vcmp.ge.f32.partialorder %v303, 0.0
      %vm336 = vcmp.ge.f32.partialorder %v304, 0.0
      %vm337 = vcmp.ge.f32.partialorder %v305, 0.0
      %vm338 = vcmp.ge.f32.partialorder %v306, 0.0
      %vm339 = vcmp.ge.f32.partialorder %v307, 0.0
      %vm340 = vcmp.ge.f32.partialorder %v308, 0.0
      %vm341 = vcmp.ge.f32.partialorder %v309, 0.0
      %vm342 = vcmp.ge.f32.partialorder %v310, 0.0
      %vm343 = vcmp.ge.f32.partialorder %v311, 0.0
      %vm344 = vcmp.ge.f32.partialorder %v312, 0.0
      %vm345 = vcmp.ge.f32.partialorder %v313, 0.0
      %vm346 = vcmp.ge.f32.partialorder %v314, 0.0
      %vm347 = vcmp.ge.f32.partialorder %v315, 0.0
      %v348 = vmul.f32 %v284, 0.01
      %v349 = vmul.f32 %v285, 0.01
      %v350 = vmul.f32 %v286, 0.01
      %v351 = vmul.f32 %v287, 0.01
      %v352 = vmul.f32 %v288, 0.01
      %v353 = vmul.f32 %v289, 0.01
      %v354 = vmul.f32 %v290, 0.01
      %v355 = vmul.f32 %v291, 0.01
      %v356 = vmul.f32 %v292, 0.01
      %v357 = vmul.f32 %v293, 0.01
      %v358 = vmul.f32 %v294, 0.01
      %v359 = vmul.f32 %v295, 0.01
      %v360 = vmul.f32 %v296, 0.01
      %v361 = vmul.f32 %v297, 0.01
      %v362 = vmul.f32 %v298, 0.01
      %v363 = vmul.f32 %v299, 0.01
      %v364 = vmul.f32 %v300, 0.01
      %v365 = vmul.f32 %v301, 0.01
      %v366 = vmul.f32 %v302, 0.01
      %v367 = vmul.f32 %v303, 0.01
      %v368 = vmul.f32 %v304, 0.01
      %v369 = vmul.f32 %v305, 0.01
      %v370 = vmul.f32 %v306, 0.01
      %v371 = vmul.f32 %v307, 0.01
      %v372 = vmul.f32 %v308, 0.01
      %v373 = vmul.f32 %v309, 0.01
      %v374 = vmul.f32 %v310, 0.01
      %v375 = vmul.f32 %v311, 0.01
      %v376 = vmul.f32 %v312, 0.01
      %v377 = vmul.f32 %v313, 0.01
      %v378 = vmul.f32 %v314, 0.01
      %v379 = vmul.f32 %v315, 0.01
      %v380 = vsel %vm316, %v284, %v348
      %v381 = vsel %vm317, %v285, %v349
      %v382 = vsel %vm318, %v286, %v350
      %v383 = vsel %vm319, %v287, %v351
      %v384 = vsel %vm320, %v288, %v352
      %v385 = vsel %vm321, %v289, %v353
      %v386 = vsel %vm322, %v290, %v354
      %v387 = vsel %vm323, %v291, %v355
      %v388 = vsel %vm324, %v292, %v356
      %v389 = vsel %vm325, %v293, %v357
      %v390 = vsel %vm326, %v294, %v358
      %v391 = vsel %vm327, %v295, %v359
      %v392 = vsel %vm328, %v296, %v360
      %v393 = vsel %vm329, %v297, %v361
      %v394 = vsel %vm330, %v298, %v362
      %v395 = vsel %vm331, %v299, %v363
      %v396 = vsel %vm332, %v300, %v364
      %v397 = vsel %vm333, %v301, %v365
      %v398 = vsel %vm334, %v302, %v366
      %v399 = vsel %vm335, %v303, %v367
      %v400 = vsel %vm336, %v304, %v368
      %v401 = vsel %vm337, %v305, %v369
      %v402 = vsel %vm338, %v306, %v370
      %v403 = vsel %vm339, %v307, %v371
      %v404 = vsel %vm340, %v308, %v372
      %v405 = vsel %vm341, %v309, %v373
      %v406 = vsel %vm342, %v310, %v374
      %v407 = vsel %vm343, %v311, %v375
      %v408 = vsel %vm344, %v312, %v376
      %v409 = vsel %vm345, %v313, %v377
      %v410 = vsel %vm346, %v314, %v378
      %v411 = vsel %vm347, %v315, %v379
      %412 = vst [vmem:[%s172] sm:$0xff] %v380
      %413 = vst [vmem:[%s172 + $0x8] sm:$0xff] %v381
      %414 = vst [vmem:[%s172 + $0x10] sm:$0xff] %v382
      %415 = vst [vmem:[%s172 + $0x18] sm:$0xff] %v383
      %416 = vst [vmem:[%s172 + $0x20] sm:$0xff] %v384
      %417 = vst [vmem:[%s172 + $0x28] sm:$0xff] %v385
      %418 = vst [vmem:[%s172 + $0x30] sm:$0xff] %v386
      %419 = vst [vmem:[%s172 + $0x38] sm:$0xff] %v387
      %420 = vst [vmem:[%s172 + $0x40] sm:$0xff] %v388
      %421 = vst [vmem:[%s172 + $0x48] sm:$0xff] %v389
      %422 = vst [vmem:[%s172 + $0x50] sm:$0xff] %v390
      %423 = vst [vmem:[%s172 + $0x58] sm:$0xff] %v391
      %424 = vst [vmem:[%s172 + $0x60] sm:$0xff] %v392
      %425 = vst [vmem:[%s172 + $0x68] sm:$0xff] %v393
      %426 = vst [vmem:[%s172 + $0x70] sm:$0xff] %v394
      %427 = vst [vmem:[%s172 + $0x78] sm:$0xff] %v395
      %428 = vst [vmem:[%s172 + $0x80] sm:$0xff] %v396
      %429 = vst [vmem:[%s172 + $0x88] sm:$0xff] %v397
      %430 = vst [vmem:[%s172 + $0x90] sm:$0xff] %v398
      %431 = vst [vmem:[%s172 + $0x98] sm:$0xff] %v399
      %432 = vst [vmem:[%s172 + $0xa0] sm:$0xff] %v400
      %433 = vst [vmem:[%s172 + $0xa8] sm:$0xff] %v401
      %434 = vst [vmem:[%s172 + $0xb0] sm:$0xff] %v402
      %435 = vst [vmem:[%s172 + $0xb8] sm:$0xff] %v403
      %436 = vst [vmem:[%s172 + $0xc0] sm:$0xff] %v404
      %437 = vst [vmem:[%s172 + $0xc8] sm:$0xff] %v405
      %438 = vst [vmem:[%s172 + $0xd0] sm:$0xff] %v406
      %439 = vst [vmem:[%s172 + $0xd8] sm:$0xff] %v407
      %440 = vst [vmem:[%s172 + $0xe0] sm:$0xff] %v408
      %441 = vst [vmem:[%s172 + $0xe8] sm:$0xff] %v409
      %442 = vst [vmem:[%s172 + $0xf0] sm:$0xff] %v410
      %443 = vst [vmem:[%s172 + $0xf8] sm:$0xff] %v411
      %s444 = smul.u32 32, %s14
      %p445 = scmp.lt.s32.totalorder %s444, 63
      %s446 = scalar_select %p445, %s444, 63
      %s447 = smul.addr %s446, 8
      %s448 = scalar_lea.vmem %s3, %s447
      // Predicated region
      $region33: #{vgg_block_forward.11} parent=31 // pred_check
        %p449 = pneg %p100
      $region34: #{vgg_block_forward.11} parent=31 // pred_check_branch
        %451 = sbr.rel (%p449) target = $region36
      $region35: #{vgg_block_forward.11} parent=31 // pred_region
        %s452 = smul.u32 32, %s14
      $region36: #{vgg_block_forward.11} parent=31 // pred_fallthru
        _
    $region32: #{vgg_block_forward.11} parent=5 // pred_fallthru
      _
    %p453 = scmp.le.s32.totalorder 2, %s9
    // Predicated region
    $region37: #{vgg_block_forward.11} parent=5 // pred_check
      %p454 = pneg %p453
    $region38: #{vgg_block_forward.11} parent=5 // pred_check_branch
      %456 = sbr.rel (%p454) target = $region40
    $region39: #{vgg_block_forward.11} parent=5 // pred_region
      %s457 = ssub.s32 %s9, 2
      // Predicated region
      $region41: #{vgg_block_forward.11} parent=39 // pred_check
        %p458 = pneg %p106
      $region42: #{vgg_block_forward.11} parent=39 // pred_check_branch
        %460 = sbr.rel (%p458) target = $region44
      $region43: #{vgg_block_forward.11} parent=39 // pred_region
        %s461 = smul.u32 32, %s15
        %p462 = scmp.lt.s32.totalorder %s461, 63
        %s463 = scalar_select %p462, %s461, 63
        %s464 = smul.addr %s463, 8
        %s465 = scalar_lea.vmem %s3, %s464
      $region44: #{vgg_block_forward.11} parent=39 // pred_fallthru
        _
    $region40: #{vgg_block_forward.11} parent=5 // pred_fallthru
      _
  $region6: #{vgg_block_forward.11} parent=0 // loop_footer
    %s13 = sadd.s32 1, %s9
  $region7: #{vgg_block_forward.11} parent=0 // loop_footer_branch
    %8 = sbr.rel target = $region3
  $region8: #{vgg_block_forward.11} parent=0 // loop_exit
    _

</llo_original>
